<compile_context>
chip_gen: v7x
topology: tpu7x:2x2x1
jax: 0.10.0
libtpu: 0.0.40
codegen_flags: <defaults>
</compile_context>

<pallas_src>
import functools

import jax
import jax.numpy as jnp
import numpy as np
from jax.experimental import pallas as pl
from jax.experimental.pallas import tpu as pltpu


def _round_up(x, m):
    return ((x + m - 1) // m) * m


def _plan_lane_tiles(m, tile):
    """Pad m to a multiple of 128 and pick a tile that divides the padded
    extent, with >=2 grid steps when possible (keeps both v7x TensorCores
    busy; bounds padding waste to <= (steps-1)*128 lanes)."""
    m128 = _round_up(m, 128)
    nblk = m128 // 128
    steps = max(pl.cdiv(m128, tile), 2 if nblk >= 2 else 1)
    steps = min(steps, nblk)
    blk_per_step = pl.cdiv(nblk, steps)
    tile_eff = blk_per_step * 128
    return steps * tile_eff, tile_eff, steps


# ---------------------------------------------------------------------------
# Pallas kernels
# ---------------------------------------------------------------------------
def _conv_pool_kernel(w_ref, cols_ref, b_ref, o_ref, *, coutp):
    """Fused conv + bias + ReLU + maxpool(2,2) for one lane tile.

    w_ref:    (4*coutp, K) bf16  -- 4 pool-phase filter banks stacked on rows
    cols_ref: (K, TM)      bf16  -- stride-2 (k+1)x(k+1) im2col patch columns
    b_ref:    (coutp, 1)   f32
    o_ref:    (coutp, TM)  bf16  -- pooled output tile (lane-dense)
    """
    # Single MXU push for all 4 pool phases, f32 accumulation.
    y = jnp.dot(w_ref[...], cols_ref[...], preferred_element_type=jnp.float32)
    # Phase max on the VPU over 8-aligned row slices (pool folded into weights).
    m = jnp.maximum(
        jnp.maximum(y[0 * coutp:1 * coutp], y[1 * coutp:2 * coutp]),
        jnp.maximum(y[2 * coutp:3 * coutp], y[3 * coutp:4 * coutp]),
    )
    o_ref[...] = jnp.maximum(m + b_ref[...], 0.0).astype(o_ref.dtype)


def _mlp_kernel(x_ref, w1_ref, b1_ref, w2_ref, b2_ref, w3_ref, b3_ref, o_ref):
    """Fused fc1(relu) -> fc2(relu) -> fc3 in (feature, batch) orientation;
    intermediates never leave VMEM."""
    x = x_ref[...]
    h = jnp.dot(w1_ref[...], x, preferred_element_type=jnp.float32)
    h = jnp.maximum(h + b1_ref[...], 0.0).astype(jnp.bfloat16)
    h = jnp.dot(w2_ref[...], h, preferred_element_type=jnp.float32)
    h = jnp.maximum(h + b2_ref[...], 0.0).astype(jnp.bfloat16)
    y = jnp.dot(w3_ref[...], h, preferred_element_type=jnp.float32) + b3_ref[...]
    o_ref[...] = y.astype(o_ref.dtype)


# ---------------------------------------------------------------------------
# Conv + ReLU + MaxPool(2,2) layer, activations in (C, H, W, N) layout
# ---------------------------------------------------------------------------
def conv_relu_pool(x_chwn, w_stack, b_pad, *, cout, k, tm=1024):
    """x_chwn: (Cin, H, W, N); w_stack: (4*coutp, Cin*(k+1)^2) bf16 phase-folded
    filters; b_pad: (coutp, 1) f32.  Returns (cout, Hp, Wp, N) bf16."""
    cin, h, wdt, n = x_chwn.shape
    coutp = w_stack.shape[0] // 4
    kk = k + 1  # union of the 5x5 receptive fields across the 2x2 pool window
    hp, wp = (h - k + 1) // 2, (wdt - k + 1) // 2
    kdim = cin * kk * kk
    mq = hp * wp * n

    # im2col of (k+1)x(k+1), stride-2 patches: one bf16 column per *pooled*
    # output, columns ordered (hp, wp, n) so conv2's output is already the
    # flattened (feature, batch) matrix the FC head wants.
    pats = []
    for a in range(kk):
        for bb in range(kk):
            pats.append(x_chwn[:, a:a + 2 * hp - 1:2, bb:bb + 2 * wp - 1:2, :])
    cols = jnp.stack(pats, axis=1).reshape(kdim, mq).astype(jnp.bfloat16)

    mpad, tm_eff, steps = _plan_lane_tiles(mq, tm)
    if mpad != mq:
        cols = jnp.pad(cols, ((0, 0), (0, mpad - mq)))

    out = pl.pallas_call(
        functools.partial(_conv_pool_kernel, coutp=coutp),
        out_shape=jax.ShapeDtypeStruct((coutp, mpad), jnp.bfloat16),
        grid=(steps,),
        in_specs=[
            pl.BlockSpec((4 * coutp, kdim), lambda i: (0, 0)),
            pl.BlockSpec((kdim, tm_eff), lambda i: (0, i)),
            pl.BlockSpec((coutp, 1), lambda i: (0, 0)),
        ],
        out_specs=pl.BlockSpec((coutp, tm_eff), lambda i: (0, i)),
        compiler_params=pltpu.CompilerParams(
            dimension_semantics=("parallel",),
            # Let XLA fuse the im2col slice/stack/cast/pad into the cols input
            # DMA rather than materializing the 9x-expanded array in HBM.
            allow_input_fusion=[False, True, False],
        ),
    )(w_stack, cols, b_pad)

    return out[:cout, :mq].reshape(cout, hp, wp, n)


# ---------------------------------------------------------------------------
# Fused FC head (feature-major: weights used as-is, no per-call transposes)
# ---------------------------------------------------------------------------
def mlp_head(x_fm, kp, *, tn=512):
    """x_fm: (400, N) bf16 feature-major (rows = torch flatten order).
    Fused fc1(relu)->fc2(relu)->fc3; returns (N, 10) f32."""
    kdim, n = x_fm.shape
    if n <= tn:
        npad, tn_eff, steps = n, n, 1
    else:
        npad, tn_eff, steps = _plan_lane_tiles(n, tn)
        if npad != n:
            x_fm = jnp.pad(x_fm, ((0, 0), (0, npad - n)))

    w1, b1 = kp["fc1_w"], kp["fc1_b"]
    w2, b2 = kp["fc2_w"], kp["fc2_b"]
    w3, b3 = kp["fc3_w"], kp["fc3_b"]
    nout = w3.shape[0]

    out = pl.pallas_call(
        _mlp_kernel,
        out_shape=jax.ShapeDtypeStruct((nout, npad), jnp.float32),
        grid=(steps,),
        in_specs=[
            pl.BlockSpec((kdim, tn_eff), lambda i: (0, i)),
            pl.BlockSpec(w1.shape, lambda i: (0, 0)),
            pl.BlockSpec(b1.shape, lambda i: (0, 0)),
            pl.BlockSpec(w2.shape, lambda i: (0, 0)),
            pl.BlockSpec(b2.shape, lambda i: (0, 0)),
            pl.BlockSpec(w3.shape, lambda i: (0, 0)),
            pl.BlockSpec(b3.shape, lambda i: (0, 0)),
        ],
        out_specs=pl.BlockSpec((nout, tn_eff), lambda i: (0, i)),
        compiler_params=pltpu.CompilerParams(dimension_semantics=("parallel",)),
    )(x_fm, w1, b1, w2, b2, w3, b3)
    return out[:, :n].T


# ---------------------------------------------------------------------------
# Parameters (PyTorch-style) and one-time kernel-ready preparation
# ---------------------------------------------------------------------------
def init_params(key):
    def uniform(key, shape, fan_in):
        bound = 1.0 / np.sqrt(fan_in)
        return jax.random.uniform(key, shape, jnp.float32, -bound, bound)

    ks = jax.random.split(key, 10)
    p = {}
    p["w1"] = uniform(ks[0], (6, 3, 5, 5), 3 * 5 * 5)
    p["b1"] = uniform(ks[1], (6,), 3 * 5 * 5)
    p["w2"] = uniform(ks[2], (16, 6, 5, 5), 6 * 5 * 5)
    p["b2"] = uniform(ks[3], (16,), 6 * 5 * 5)
    p["fc1_w"] = uniform(ks[4], (120, 400), 400)
    p["fc1_b"] = uniform(ks[5], (120,), 400)
    p["fc2_w"] = uniform(ks[6], (84, 120), 120)
    p["fc2_b"] = uniform(ks[7], (84,), 120)
    p["fc3_w"] = uniform(ks[8], (10, 84), 84)
    p["fc3_b"] = uniform(ks[9], (10,), 84)
    return p


def _fold_pool_phases(w, b):
    """(Cout,Cin,k,k) filter -> (4*coutp, Cin*(k+1)^2) bf16 phase-stacked GEMM
    weights (maxpool folded into 4 shifted filter banks) + padded f32 bias."""
    cout, cin, k, _ = w.shape
    coutp = _round_up(cout, 8)
    kk = k + 1
    banks = []
    for dy in range(2):
        for dx in range(2):
            canvas = jnp.zeros((coutp, cin, kk, kk), jnp.float32)
            canvas = canvas.at[:cout, :, dy:dy + k, dx:dx + k].set(w)
            banks.append(canvas.reshape(coutp, cin * kk * kk))
    w_stack = jnp.concatenate(banks, axis=0).astype(jnp.bfloat16)
    b_pad = jnp.zeros((coutp, 1), jnp.float32).at[:cout, 0].set(b)
    return w_stack, b_pad


def prepare_params(p):
    """One-time conversion of PyTorch-style params into kernel-ready tensors."""
    kp = {}
    kp["conv1_w"], kp["conv1_b"] = _fold_pool_phases(p["w1"], p["b1"])
    kp["conv2_w"], kp["conv2_b"] = _fold_pool_phases(p["w2"], p["b2"])
    for i in (1, 2, 3):
        kp[f"fc{i}_w"] = p[f"fc{i}_w"].astype(jnp.bfloat16)
        kp[f"fc{i}_b"] = p[f"fc{i}_b"].reshape(-1, 1).astype(jnp.float32)
    return kp


# ---------------------------------------------------------------------------
# Forward pass (matches torch Net.forward)
# ---------------------------------------------------------------------------
def net_forward(x, kp):
    """x: (N, 3, 32, 32) NCHW -> logits (N, 10)."""
    n = x.shape[0]
    # Single layout change: NCHW -> (C, H, W, N); activations stay there.
    # NOTE: the pool-folding (max/bias/ReLU commute, (k+1)^2 stride-2 patch
    # union) assumes even conv output dims, which holds for 32x32 inputs.
    x_cm = jnp.transpose(x, (1, 2, 3, 0))
    a1 = conv_relu_pool(x_cm, kp["conv1_w"], kp["conv1_b"], cout=6, k=5)   # (6,14,14,N)
    a2 = conv_relu_pool(a1, kp["conv2_w"], kp["conv2_b"], cout=16, k=5)    # (16,5,5,N)
    flat = a2.reshape(16 * 5 * 5, n)   # free reshape: rows already (c,h,w)-ordered
    return mlp_head(flat, kp)          # (N, 10)


# Pure-jnp reference for a sanity check (no Pallas).
def net_forward_ref(x, p):
    def conv(x, w, b):
        y = jax.lax.conv_general_dilated(
            x, w, window_strides=(1, 1), padding="VALID",
            dimension_numbers=("NCHW", "OIHW", "NCHW"),
        )
        return jax.nn.relu(y + b.reshape(1, -1, 1, 1))

    def pool(x):
        n, c, h, w = x.shape
        return x.reshape(n, c, h // 2, 2, w // 2, 2).max(axis=(3, 5))

    x = pool(conv(x, p["w1"], p["b1"]))
    x = pool(conv(x, p["w2"], p["b2"]))
    x = x.reshape(x.shape[0], -1)
    x = jax.nn.relu(x @ p["fc1_w"].T + p["fc1_b"])
    x = jax.nn.relu(x @ p["fc2_w"].T + p["fc2_b"])
    return x @ p["fc3_w"].T + p["fc3_b"]


if __name__ == "__main__":
    key = jax.random.PRNGKey(0)
    pkey, xkey = jax.random.split(key)
    params = init_params(pkey)
    kparams = prepare_params(params)
    # Net requires 32x32 spatial input (fc1 expects 16*5*5 features); batch=2.
    x = jax.random.normal(xkey, (2, 3, 32, 32), jnp.float32)

    out = jax.block_until_ready(jax.jit(net_forward)(x, kparams))
    ref = jax.block_until_ready(jax.jit(net_forward_ref)(x, params))

    assert out.shape == (2, 10) and out.dtype == jnp.float32
    np.testing.assert_allclose(np.asarray(out), np.asarray(ref), rtol=2e-2, atol=2e-2)
    print("KERNEL_OK")
</pallas_src>

<mosaic_0001>
module attributes {stable_mosaic.version = 11 : i64} {
  func.func @_conv_pool_kernel(%arg0: i32, %arg1: memref<32x108xbf16, #tpu.memory_space<vmem>>, %arg2: memref<108x256xbf16, #tpu.memory_space<vmem>>, %arg3: memref<8x1xf32, #tpu.memory_space<vmem>>, %arg4: memref<8x256xbf16, #tpu.memory_space<vmem>>) attributes {dimension_semantics = [#tpu.dimension_semantics<parallel>], iteration_bounds = array<i64: 2>, scalar_prefetch = 0 : i64, scratch_operands = 0 : i64, tpu.core_type = #tpu.core_type<tc>, window_params = [{pipeline_mode = #tpu.pipeline_mode<synchronous>, transform_indices = @transform_0, window_bounds = array<i64: 32, 108>}, {transform_indices = @transform_1, window_bounds = array<i64: 108, 256>}, {pipeline_mode = #tpu.pipeline_mode<synchronous>, transform_indices = @transform_2, window_bounds = array<i64: 8, 1>}, {transform_indices = @transform_3, window_bounds = array<i64: 8, 256>}]} {
    %c0 = arith.constant 0 : index
    %c0_0 = arith.constant 0 : index
    %0 = vector.load %arg1[%c0, %c0_0] : memref<32x108xbf16, #tpu.memory_space<vmem>>, vector<32x108xbf16>
    %c0_1 = arith.constant 0 : index
    %c0_2 = arith.constant 0 : index
    %1 = vector.load %arg2[%c0_1, %c0_2] : memref<108x256xbf16, #tpu.memory_space<vmem>>, vector<108x256xbf16>
    %cst = arith.constant dense<0.000000e+00> : vector<32x256xf32>
    %2 = tpu.matmul %0, %1, %cst {dimension_numbers = #tpu.dot_dimension_numbers<[1], [0], [0], [1], [0, 0, 1, 1], [], []>} : vector<32x108xbf16>, vector<108x256xbf16>, vector<32x256xf32> -> vector<32x256xf32>
    %3 = vector.extract_strided_slice %2 {offsets = [0, 0], sizes = [8, 256], strides = [1, 1]} : vector<32x256xf32> to vector<8x256xf32>
    %4 = vector.extract_strided_slice %2 {offsets = [8, 0], sizes = [8, 256], strides = [1, 1]} : vector<32x256xf32> to vector<8x256xf32>
    %5 = arith.maximumf %3, %4 : vector<8x256xf32>
    %6 = vector.extract_strided_slice %2 {offsets = [16, 0], sizes = [8, 256], strides = [1, 1]} : vector<32x256xf32> to vector<8x256xf32>
    %7 = vector.extract_strided_slice %2 {offsets = [24, 0], sizes = [8, 256], strides = [1, 1]} : vector<32x256xf32> to vector<8x256xf32>
    %8 = arith.maximumf %6, %7 : vector<8x256xf32>
    %9 = arith.maximumf %5, %8 : vector<8x256xf32>
    %c0_3 = arith.constant 0 : index
    %c0_4 = arith.constant 0 : index
    %10 = vector.load %arg3[%c0_3, %c0_4] : memref<8x1xf32, #tpu.memory_space<vmem>>, vector<8x1xf32>
    %11 = vector.broadcast %10 : vector<8x1xf32> to vector<8x256xf32>
    %12 = arith.addf %9, %11 : vector<8x256xf32>
    %cst_5 = arith.constant 0.000000e+00 : f32
    %13 = vector.broadcast %cst_5 : f32 to vector<8x256xf32>
    %14 = arith.maximumf %12, %13 : vector<8x256xf32>
    %15 = arith.truncf %14 : vector<8x256xf32> to vector<8x256xbf16>
    %c0_6 = arith.constant 0 : index
    %c0_7 = arith.constant 0 : index
    %16 = vector.load %arg4[%c0_6, %c0_7] : memref<8x256xbf16, #tpu.memory_space<vmem>>, vector<8x256xbf16>
    tpu.vector_store %arg4[%c0_6, %c0_7], %15 {strides = array<i32>} : memref<8x256xbf16, #tpu.memory_space<vmem>>, vector<8x256xbf16>,
    return
  }
  func.func @transform_0(%arg0: i32) -> (i32, i32) {
    %c0_i32 = arith.constant 0 : i32
    %c0_i32_0 = arith.constant 0 : i32
    %c0_i32_1 = arith.constant 0 : i32
    return %c0_i32, %c0_i32_0 : i32, i32
  }
  func.func @transform_1(%arg0: i32) -> (i32, i32) {
    %c0_i32 = arith.constant 0 : i32
    %c0_i32_0 = arith.constant 0 : i32
    return %c0_i32, %arg0 : i32, i32
  }
  func.func @transform_2(%arg0: i32) -> (i32, i32) {
    %c0_i32 = arith.constant 0 : i32
    %c0_i32_0 = arith.constant 0 : i32
    %c0_i32_1 = arith.constant 0 : i32
    return %c0_i32, %c0_i32_0 : i32, i32
  }
  func.func @transform_3(%arg0: i32) -> (i32, i32) {
    %c0_i32 = arith.constant 0 : i32
    %c0_i32_0 = arith.constant 0 : i32
    return %c0_i32, %arg0 : i32, i32
  }
}

module attributes {stable_mosaic.version = 11 : i64} {
  func.func @_conv_pool_kernel(%arg0: i32, %arg1: memref<64x216xbf16, #tpu.memory_space<vmem>>, %arg2: memref<216x128xbf16, #tpu.memory_space<vmem>>, %arg3: memref<16x1xf32, #tpu.memory_space<vmem>>, %arg4: memref<16x128xbf16, #tpu.memory_space<vmem>>) attributes {dimension_semantics = [#tpu.dimension_semantics<parallel>], iteration_bounds = array<i64: 1>, scalar_prefetch = 0 : i64, scratch_operands = 0 : i64, tpu.core_type = #tpu.core_type<tc>, window_params = [{pipeline_mode = #tpu.pipeline_mode<synchronous>, transform_indices = @transform_0, window_bounds = array<i64: 64, 216>}, {transform_indices = @transform_1, window_bounds = array<i64: 216, 128>}, {pipeline_mode = #tpu.pipeline_mode<synchronous>, transform_indices = @transform_2, window_bounds = array<i64: 16, 1>}, {transform_indices = @transform_3, window_bounds = array<i64: 16, 128>}]} {
    %c0 = arith.constant 0 : index
    %c0_0 = arith.constant 0 : index
    %0 = vector.load %arg1[%c0, %c0_0] : memref<64x216xbf16, #tpu.memory_space<vmem>>, vector<64x216xbf16>
    %c0_1 = arith.constant 0 : index
    %c0_2 = arith.constant 0 : index
    %1 = vector.load %arg2[%c0_1, %c0_2] : memref<216x128xbf16, #tpu.memory_space<vmem>>, vector<216x128xbf16>
    %cst = arith.constant dense<0.000000e+00> : vector<64x128xf32>
    %2 = tpu.matmul %0, %1, %cst {dimension_numbers = #tpu.dot_dimension_numbers<[1], [0], [0], [1], [0, 0, 1, 1], [], []>} : vector<64x216xbf16>, vector<216x128xbf16>, vector<64x128xf32> -> vector<64x128xf32>
    %3 = vector.extract_strided_slice %2 {offsets = [0, 0], sizes = [16, 128], strides = [1, 1]} : vector<64x128xf32> to vector<16x128xf32>
    %4 = vector.extract_strided_slice %2 {offsets = [16, 0], sizes = [16, 128], strides = [1, 1]} : vector<64x128xf32> to vector<16x128xf32>
    %5 = arith.maximumf %3, %4 : vector<16x128xf32>
    %6 = vector.extract_strided_slice %2 {offsets = [32, 0], sizes = [16, 128], strides = [1, 1]} : vector<64x128xf32> to vector<16x128xf32>
    %7 = vector.extract_strided_slice %2 {offsets = [48, 0], sizes = [16, 128], strides = [1, 1]} : vector<64x128xf32> to vector<16x128xf32>
    %8 = arith.maximumf %6, %7 : vector<16x128xf32>
    %9 = arith.maximumf %5, %8 : vector<16x128xf32>
    %c0_3 = arith.constant 0 : index
    %c0_4 = arith.constant 0 : index
    %10 = vector.load %arg3[%c0_3, %c0_4] : memref<16x1xf32, #tpu.memory_space<vmem>>, vector<16x1xf32>
    %11 = vector.broadcast %10 : vector<16x1xf32> to vector<16x128xf32>
    %12 = arith.addf %9, %11 : vector<16x128xf32>
    %cst_5 = arith.constant 0.000000e+00 : f32
    %13 = vector.broadcast %cst_5 : f32 to vector<16x128xf32>
    %14 = arith.maximumf %12, %13 : vector<16x128xf32>
    %15 = arith.truncf %14 : vector<16x128xf32> to vector<16x128xbf16>
    %c0_6 = arith.constant 0 : index
    %c0_7 = arith.constant 0 : index
    %16 = vector.load %arg4[%c0_6, %c0_7] : memref<16x128xbf16, #tpu.memory_space<vmem>>, vector<16x128xbf16>
    tpu.vector_store %arg4[%c0_6, %c0_7], %15 {strides = array<i32>} : memref<16x128xbf16, #tpu.memory_space<vmem>>, vector<16x128xbf16>,
    return
  }
  func.func @transform_0(%arg0: i32) -> (i32, i32) {
    %c0_i32 = arith.constant 0 : i32
    %c0_i32_0 = arith.constant 0 : i32
    %c0_i32_1 = arith.constant 0 : i32
    return %c0_i32, %c0_i32_0 : i32, i32
  }
  func.func @transform_1(%arg0: i32) -> (i32, i32) {
    %c0_i32 = arith.constant 0 : i32
    %c0_i32_0 = arith.constant 0 : i32
    return %c0_i32, %arg0 : i32, i32
  }
  func.func @transform_2(%arg0: i32) -> (i32, i32) {
    %c0_i32 = arith.constant 0 : i32
    %c0_i32_0 = arith.constant 0 : i32
    %c0_i32_1 = arith.constant 0 : i32
    return %c0_i32, %c0_i32_0 : i32, i32
  }
  func.func @transform_3(%arg0: i32) -> (i32, i32) {
    %c0_i32 = arith.constant 0 : i32
    %c0_i32_0 = arith.constant 0 : i32
    return %c0_i32, %arg0 : i32, i32
  }
}

module attributes {stable_mosaic.version = 11 : i64} {
  func.func @_mlp_kernel(%arg0: i32, %arg1: memref<400x2xbf16, #tpu.memory_space<vmem>>, %arg2: memref<120x400xbf16, #tpu.memory_space<vmem>>, %arg3: memref<120x1xf32, #tpu.memory_space<vmem>>, %arg4: memref<84x120xbf16, #tpu.memory_space<vmem>>, %arg5: memref<84x1xf32, #tpu.memory_space<vmem>>, %arg6: memref<10x84xbf16, #tpu.memory_space<vmem>>, %arg7: memref<10x1xf32, #tpu.memory_space<vmem>>, %arg8: memref<10x2xf32, #tpu.memory_space<vmem>>) attributes {dimension_semantics = [#tpu.dimension_semantics<parallel>], iteration_bounds = array<i64: 1>, scalar_prefetch = 0 : i64, scratch_operands = 0 : i64, tpu.core_type = #tpu.core_type<tc>, window_params = [{transform_indices = @transform_0, window_bounds = array<i64: 400, 2>}, {pipeline_mode = #tpu.pipeline_mode<synchronous>, transform_indices = @transform_1, window_bounds = array<i64: 120, 400>}, {pipeline_mode = #tpu.pipeline_mode<synchronous>, transform_indices = @transform_2, window_bounds = array<i64: 120, 1>}, {pipeline_mode = #tpu.pipeline_mode<synchronous>, transform_indices = @transform_3, window_bounds = array<i64: 84, 120>}, {pipeline_mode = #tpu.pipeline_mode<synchronous>, transform_indices = @transform_4, window_bounds = array<i64: 84, 1>}, {pipeline_mode = #tpu.pipeline_mode<synchronous>, transform_indices = @transform_5, window_bounds = array<i64: 10, 84>}, {pipeline_mode = #tpu.pipeline_mode<synchronous>, transform_indices = @transform_6, window_bounds = array<i64: 10, 1>}, {transform_indices = @transform_7, window_bounds = array<i64: 10, 2>}]} {
    %c0 = arith.constant 0 : index
    %c0_0 = arith.constant 0 : index
    %0 = vector.load %arg1[%c0, %c0_0] : memref<400x2xbf16, #tpu.memory_space<vmem>>, vector<400x2xbf16>
    %c0_1 = arith.constant 0 : index
    %c0_2 = arith.constant 0 : index
    %1 = vector.load %arg2[%c0_1, %c0_2] : memref<120x400xbf16, #tpu.memory_space<vmem>>, vector<120x400xbf16>
    %cst = arith.constant dense<0.000000e+00> : vector<120x2xf32>
    %2 = tpu.matmul %1, %0, %cst {dimension_numbers = #tpu.dot_dimension_numbers<[1], [0], [0], [1], [0, 0, 1, 1], [], []>} : vector<120x400xbf16>, vector<400x2xbf16>, vector<120x2xf32> -> vector<120x2xf32>
    %c0_3 = arith.constant 0 : index
    %c0_4 = arith.constant 0 : index
    %3 = vector.load %arg3[%c0_3, %c0_4] : memref<120x1xf32, #tpu.memory_space<vmem>>, vector<120x1xf32>
    %4 = vector.broadcast %3 : vector<120x1xf32> to vector<120x2xf32>
    %5 = arith.addf %2, %4 : vector<120x2xf32>
    %cst_5 = arith.constant 0.000000e+00 : f32
    %6 = vector.broadcast %cst_5 : f32 to vector<120x2xf32>
    %7 = arith.maximumf %5, %6 : vector<120x2xf32>
    %8 = arith.truncf %7 : vector<120x2xf32> to vector<120x2xbf16>
    %c0_6 = arith.constant 0 : index
    %c0_7 = arith.constant 0 : index
    %9 = vector.load %arg4[%c0_6, %c0_7] : memref<84x120xbf16, #tpu.memory_space<vmem>>, vector<84x120xbf16>
    %cst_8 = arith.constant dense<0.000000e+00> : vector<84x2xf32>
    %10 = tpu.matmul %9, %8, %cst_8 {dimension_numbers = #tpu.dot_dimension_numbers<[1], [0], [0], [1], [0, 0, 1, 1], [], []>} : vector<84x120xbf16>, vector<120x2xbf16>, vector<84x2xf32> -> vector<84x2xf32>
    %c0_9 = arith.constant 0 : index
    %c0_10 = arith.constant 0 : index
    %11 = vector.load %arg5[%c0_9, %c0_10] : memref<84x1xf32, #tpu.memory_space<vmem>>, vector<84x1xf32>
    %12 = vector.broadcast %11 : vector<84x1xf32> to vector<84x2xf32>
    %13 = arith.addf %10, %12 : vector<84x2xf32>
    %cst_11 = arith.constant 0.000000e+00 : f32
    %14 = vector.broadcast %cst_11 : f32 to vector<84x2xf32>
    %15 = arith.maximumf %13, %14 : vector<84x2xf32>
    %16 = arith.truncf %15 : vector<84x2xf32> to vector<84x2xbf16>
    %c0_12 = arith.constant 0 : index
    %c0_13 = arith.constant 0 : index
    %17 = vector.load %arg6[%c0_12, %c0_13] : memref<10x84xbf16, #tpu.memory_space<vmem>>, vector<10x84xbf16>
    %cst_14 = arith.constant dense<0.000000e+00> : vector<10x2xf32>
    %18 = tpu.matmul %17, %16, %cst_14 {dimension_numbers = #tpu.dot_dimension_numbers<[1], [0], [0], [1], [0, 0, 1, 1], [], []>} : vector<10x84xbf16>, vector<84x2xbf16>, vector<10x2xf32> -> vector<10x2xf32>
    %c0_15 = arith.constant 0 : index
    %c0_16 = arith.constant 0 : index
    %19 = vector.load %arg7[%c0_15, %c0_16] : memref<10x1xf32, #tpu.memory_space<vmem>>, vector<10x1xf32>
    %20 = vector.broadcast %19 : vector<10x1xf32> to vector<10x2xf32>
    %21 = arith.addf %18, %20 : vector<10x2xf32>
    %c0_17 = arith.constant 0 : index
    %c0_18 = arith.constant 0 : index
    %22 = vector.load %arg8[%c0_17, %c0_18] : memref<10x2xf32, #tpu.memory_space<vmem>>, vector<10x2xf32>
    tpu.vector_store %arg8[%c0_17, %c0_18], %21 {strides = array<i32>} : memref<10x2xf32, #tpu.memory_space<vmem>>, vector<10x2xf32>,
    return
  }
  func.func @transform_0(%arg0: i32) -> (i32, i32) {
    %c0_i32 = arith.constant 0 : i32
    %c0_i32_0 = arith.constant 0 : i32
    return %c0_i32, %arg0 : i32, i32
  }
  func.func @transform_1(%arg0: i32) -> (i32, i32) {
    %c0_i32 = arith.constant 0 : i32
    %c0_i32_0 = arith.constant 0 : i32
    %c0_i32_1 = arith.constant 0 : i32
    return %c0_i32, %c0_i32_0 : i32, i32
  }
  func.func @transform_2(%arg0: i32) -> (i32, i32) {
    %c0_i32 = arith.constant 0 : i32
    %c0_i32_0 = arith.constant 0 : i32
    %c0_i32_1 = arith.constant 0 : i32
    return %c0_i32, %c0_i32_0 : i32, i32
  }
  func.func @transform_3(%arg0: i32) -> (i32, i32) {
    %c0_i32 = arith.constant 0 : i32
    %c0_i32_0 = arith.constant 0 : i32
    %c0_i32_1 = arith.constant 0 : i32
    return %c0_i32, %c0_i32_0 : i32, i32
  }
  func.func @transform_4(%arg0: i32) -> (i32, i32) {
    %c0_i32 = arith.constant 0 : i32
    %c0_i32_0 = arith.constant 0 : i32
    %c0_i32_1 = arith.constant 0 : i32
    return %c0_i32, %c0_i32_0 : i32, i32
  }
  func.func @transform_5(%arg0: i32) -> (i32, i32) {
    %c0_i32 = arith.constant 0 : i32
    %c0_i32_0 = arith.constant 0 : i32
    %c0_i32_1 = arith.constant 0 : i32
    return %c0_i32, %c0_i32_0 : i32, i32
  }
  func.func @transform_6(%arg0: i32) -> (i32, i32) {
    %c0_i32 = arith.constant 0 : i32
    %c0_i32_0 = arith.constant 0 : i32
    %c0_i32_1 = arith.constant 0 : i32
    return %c0_i32, %c0_i32_0 : i32, i32
  }
  func.func @transform_7(%arg0: i32) -> (i32, i32) {
    %c0_i32 = arith.constant 0 : i32
    %c0_i32_0 = arith.constant 0 : i32
    return %c0_i32, %arg0 : i32, i32
  }
}

</mosaic_0001>

<llo_original>
// kernel: net_forward.6
$region0: #{net_forward.6}
  #allocation0 [shape = 'u32[]', space=smem, size = 0x4, offset = 0x4, fixed_abs, tag = 'smem constant byte address 0x4 - core index']
  #allocation1 [shape = 'u32[144,128]{1,0:T(1,128)}', space=vmem, size = 0x12000, scoped, tag = 'internal scratch']
  #allocation2 [shape = 'u32[2048]{0}', space=vmem, size = 0x2000, scoped, tag = 'scoped memory for net_forward.6']
  #allocation3 [shape = 'u32[2048]{0}', space=vmem, size = 0x2000, scoped, tag = 'scoped memory for net_forward.6']
  #allocation4 [shape = 'u32[2048]{0}', space=vmem, size = 0x2000, scoped, tag = 'scoped memory for net_forward.6']
  #allocation5 [shape = 'u32[2048]{0}', space=vmem, size = 0x2000, scoped, tag = 'scoped memory for net_forward.6']
  #allocation6 [shape = 'u32[2048]{0}', space=vmem, size = 0x2000, scoped, tag = 'scoped memory for net_forward.6']
  %s0 = inlined_call_operand.vmem [shape: bf16[32,108], index: 0, kind: input, shape index: {}]
  %s1 = inlined_call_operand.vmem [shape: f32[8,1], index: 1, kind: input, shape index: {}]
  %s2 = inlined_call_operand.vmem [shape: bf16[108,392], index: 2, kind: input, shape index: {}]
  %s3 = inlined_call_operand.<no memory space> [shape: bf16[], index: 3, kind: input, shape index: {}]
  %s4 = inlined_call_operand.vmem [shape: bf16[8,512], index: 4, kind: output, shape index: {}]
  %s5 = sld [smem:[#allocation0]]
  $region45: #{net_forward.6} parent=0
    _
  %s7 = ssub.s32 1, %s5
  %s8 = scalar_select 0, %s7, %s5
  %v9 = vstv %s3
  %v10 = vunpack.i.l.bf16 %v9
  %v12 = vunpack.i.h.bf16 %v9
  loop: start=0, step=1, limit=4
  $region2: #{net_forward.6} parent=0 // loop_pre_header
    _
  $region3: #{net_forward.6} parent=0 // loop_header
    %s15 = sphi 0, %s19
    %p16 = scmp.ge.s32.totalorder %s15, 4
    %s23 = sphi 0, %s23
    %s25 = sphi 0, %s23
    %s26 = sphi 0, %s25
    %s40 = sphi 0, %s26
    %s46 = sphi 0, %s48
    %s49 = sphi 0, %s46
    %s50 = sphi 0, %s49
    %s66 = sphi 0, %s50
    %s70 = sphi 0, %s70
    %s72 = sphi 0, %s70
    %s73 = sphi 0, %s72
    %s87 = sphi 0, %s73
    %s93 = sphi 0, %s95
    %s96 = sphi 0, %s93
    %s97 = sphi 0, %s96
    %s113 = sphi 0, %s97
  $region4: #{net_forward.6} parent=0 // loop_header_branch
    %18 = sbr.rel (%p16) target = $region8
  $region5: #{net_forward.6} parent=0 // loop_body
    %s20 = ssub.s32 %s15, 1
    %s21 = ssub.s32 %s15, 2
    %s22 = sadd.s32 %s15, 1
    %s24 = sadd.s32 %s23, 1
    %p27 = scmp.eq.s32.totalorder %s15, 1
    %p28 = scmp.ne.s32.totalorder %s23, %s25
    %p29 = scmp.eq.s32.totalorder %s15, 0
    %p30 = por %p28, %p29
    %p31 = scmp.ne.s32.totalorder %s23, %s25
    %p32 = scmp.eq.s32.totalorder %s20, 1
    %p33 = por %p31, %p32
    %p34 = scmp.ne.s32.totalorder %s25, %s26
    %p35 = scmp.eq.s32.totalorder %s20, 0
    %p36 = por %p34, %p35
    %p37 = scmp.ne.s32.totalorder %s25, %s26
    %p38 = scmp.eq.s32.totalorder %s21, 1
    %p39 = por %p37, %p38
    %p41 = scmp.ne.s32.totalorder %s26, %s40
    %p42 = scmp.eq.s32.totalorder %s21, 0
    %p43 = por %p41, %p42
    %s44 = ssub.s32 %s15, %s22
    %p45 = scmp.eq.s32.totalorder %s44, 0
    %s47 = sadd.s32 %s46, 1
    %s48 = scalar_select %p45, %s46, %s47
    %p51 = pneg %p45
    %p52 = scmp.eq.s32.totalorder %s15, 1
    %p53 = por %p51, %p52
    %p54 = scmp.ne.s32.totalorder %s46, %s49
    %p55 = scmp.eq.s32.totalorder %s15, 0
    %p56 = por %p54, %p55
    %p57 = scmp.ne.s32.totalorder %s46, %s49
    %p58 = scmp.eq.s32.totalorder %s20, 1
    %p59 = por %p57, %p58
    %p60 = scmp.ne.s32.totalorder %s49, %s50
    %p61 = scmp.eq.s32.totalorder %s20, 0
    %p62 = por %p60, %p61
    %p63 = scmp.ne.s32.totalorder %s49, %s50
    %p64 = scmp.eq.s32.totalorder %s21, 1
    %p65 = por %p63, %p64
    %p67 = scmp.ne.s32.totalorder %s50, %s66
    %p68 = scmp.eq.s32.totalorder %s21, 0
    %p69 = por %p67, %p68
    %s71 = sadd.s32 %s70, 1
    %p74 = scmp.eq.s32.totalorder %s15, 1
    %p75 = scmp.ne.s32.totalorder %s70, %s72
    %p76 = scmp.eq.s32.totalorder %s15, 0
    %p77 = por %p75, %p76
    %p78 = scmp.ne.s32.totalorder %s70, %s72
    %p79 = scmp.eq.s32.totalorder %s20, 1
    %p80 = por %p78, %p79
    %p81 = scmp.ne.s32.totalorder %s72, %s73
    %p82 = scmp.eq.s32.totalorder %s20, 0
    %p83 = por %p81, %p82
    %p84 = scmp.ne.s32.totalorder %s72, %s73
    %p85 = scmp.eq.s32.totalorder %s21, 1
    %p86 = por %p84, %p85
    %p88 = scmp.ne.s32.totalorder %s73, %s87
    %p89 = scmp.eq.s32.totalorder %s21, 0
    %p90 = por %p88, %p89
    %s91 = ssub.s32 %s15, %s22
    %p92 = scmp.eq.s32.totalorder %s91, 0
    %s94 = sadd.s32 %s93, 1
    %s95 = scalar_select %p92, %s93, %s94
    %p98 = pneg %p92
    %p99 = scmp.eq.s32.totalorder %s15, 1
    %p100 = por %p98, %p99
    %p101 = scmp.ne.s32.totalorder %s93, %s96
    %p102 = scmp.eq.s32.totalorder %s15, 0
    %p103 = por %p101, %p102
    %p104 = scmp.ne.s32.totalorder %s93, %s96
    %p105 = scmp.eq.s32.totalorder %s20, 1
    %p106 = por %p104, %p105
    %p107 = scmp.ne.s32.totalorder %s96, %s97
    %p108 = scmp.eq.s32.totalorder %s20, 0
    %p109 = por %p107, %p108
    %p110 = scmp.ne.s32.totalorder %s96, %s97
    %p111 = scmp.eq.s32.totalorder %s21, 1
    %p112 = por %p110, %p111
    %p114 = scmp.ne.s32.totalorder %s97, %s113
    %p115 = scmp.eq.s32.totalorder %s21, 0
    %p116 = por %p114, %p115
    %p117 = scmp.le.s32.totalorder 1, %s15
    %p118 = scmp.lt.s32.totalorder %s15, 3
    %p119 = pnand %p117, %p118
    %p120 = pneg %p119
    // Predicated region
    $region9: #{net_forward.6} parent=5 // pred_check
      _
    $region10: #{net_forward.6} parent=5 // pred_check_branch
      %122 = sbr.rel (%p119) target = $region12
    $region11: #{net_forward.6} parent=5 // pred_region
      %s123 = ssub.s32 %s15, 1
      // Predicated region
      $region13: #{net_forward.6} parent=11 // pred_check
        %p124 = pneg %p36
      $region14: #{net_forward.6} parent=11 // pred_check_branch
        %126 = sbr.rel (%p124) target = $region16
      $region15: #{net_forward.6} parent=11 // pred_region
        _
      $region16: #{net_forward.6} parent=11 // pred_fallthru
        _
      // Predicated region
      $region17: #{net_forward.6} parent=11 // pred_check
        %p127 = pneg %p83
      $region18: #{net_forward.6} parent=11 // pred_check_branch
        %129 = sbr.rel (%p127) target = $region20
      $region19: #{net_forward.6} parent=11 // pred_region
        _
      $region20: #{net_forward.6} parent=11 // pred_fallthru
        _
    $region12: #{net_forward.6} parent=5 // pred_fallthru
      _
    %p130 = scmp.lt.s32.totalorder %s15, 2
    // Predicated region
    $region21: #{net_forward.6} parent=5 // pred_check
      %p131 = pneg %p130
    $region22: #{net_forward.6} parent=5 // pred_check_branch
      %133 = sbr.rel (%p131) target = $region24
    $region23: #{net_forward.6} parent=5 // pred_region
      // Predicated region
      $region25: #{net_forward.6} parent=23 // pred_check
        %p134 = pneg %p56
      $region26: #{net_forward.6} parent=23 // pred_check_branch
        %136 = sbr.rel (%p134) target = $region28
      $region27: #{net_forward.6} parent=23 // pred_region
        %s137 = smul.u32 2, %s15
        %s138 = ssub.s32 4, %s137
        %p139 = scmp.lt.s32.totalorder %s138, 2
        %s140 = scalar_select %p139, %s138, 2
        %s141 = smul.u32 896, %s140
        %p142 = scmp.lt.s32.totalorder %s137, 3
        %s143 = scalar_select %p142, %s137, 3
        %s144 = smul.addr %s143, 4
        %s145 = scalar_lea.vmem %s2, %s144
        %s146 = smul.u32 2, %s15
        %s147 = ssub.s32 4, %s146
        %p148 = scmp.lt.s32.totalorder %s147, 2
        %s149 = scalar_select %p148, %s147, 2
        %s150 = smul.u32 896, %s149
      $region28: #{net_forward.6} parent=23 // pred_fallthru
        _
    $region24: #{net_forward.6} parent=5 // pred_fallthru
      _
    %p151 = scmp.le.s32.totalorder 1, %s15
    %p152 = scmp.lt.s32.totalorder %s15, 3
    %p153 = pnand %p151, %p152
    %p154 = pneg %p153
    // Predicated region
    $region29: #{net_forward.6} parent=5 // pred_check
      _
    $region30: #{net_forward.6} parent=5 // pred_check_branch
      %156 = sbr.rel (%p153) target = $region32
    $region31: #{net_forward.6} parent=5 // pred_region
      #allocation7 [shape = 'u8[57344]{0}', space=vmem, size = 0xe000, dematerialized = true, scoped, tag = 'FusionAdapter Buffer %fusion.1 = bf16[108,512]{1,0:T(8,128)(2,1)} fusion(%param_2.143, %param_3.70), kind=kLoop, calls=%fused_computation.73.clone, metadata={op_name="jit(net_forward)/jit(_pad)/pad" stack_frame_id=12}']
      %s157 = ssub.s32 %s15, 1
      %p158 = pneg %p36
      %p159 = pneg %p33
      %s160 = smul.u32 2, %s20
      %s161 = ssub.s32 4, %s160
      %p162 = scmp.lt.s32.totalorder %s161, 2
      %s163 = scalar_select %p162, %s161, 2
      %s164 = smul.u32 896, %s163
      %p165 = scmp.lt.s32.totalorder %s160, 3
      %s166 = scalar_select %p165, %s160, 3
      %s167 = smul.addr %s166, 4
      %s168 = scalar_lea.vmem %s2, %s167
      %p169 = pneg %p62
      %p170 = pneg %p59
      %p171 = pneg %p83
      %p172 = pneg %p80
      %p173 = pneg %p109
      %p174 = pneg %p106
      %s175 = smul.u32 2, %s20
      %p176 = scmp.lt.s32.totalorder %s175, 3
      %s177 = scalar_select %p176, %s175, 3
      %s178 = smul.addr %s177, 4
      %s179 = scalar_lea.vmem %s4, %s178
      %s180 = smul.u32 2, %s20
      %s181 = ssub.s32 4, %s180
      %p182 = scmp.lt.s32.totalorder %s181, 2
      %s183 = scalar_select %p182, %s181, 2
      %s184 = smul.u32 896, %s183
      %p185 = scmp.lt.s32.totalorder %s180, 3
      %s186 = scalar_select %p185, %s180, 3
      %s187 = smul.addr %s186, 4
      %s188 = scalar_lea.vmem %s2, %s187
      %s189 = smul.u32 2, %s20
      %s190 = ssub.s32 4, %s189
      %p191 = scmp.lt.s32.totalorder %s190, 2
      %s192 = scalar_select %p191, %s190, 2
      %s193 = smul.u32 896, %s192
      %s194 = smul.u32 2, %s20
      %p195 = scmp.lt.s32.totalorder %s194, 3
      %s196 = scalar_select %p195, %s194, 3
      %s197 = smul.addr %s196, 4
      %s198 = scalar_lea.vmem %s4, %s197
      %s199 = smul.u32 2, %s20
      %v200 = vld [vmem:[%s188] sm:$0xf]
      %v201 = vunpack.c.l.bf16 %v200
      %v202 = vunpack.c.h.bf16 %v200
      %v203 = vlaneseq
      %v204 = vshrl.u32 %v203, 7
      %vm206 = vcmp.lt.s32.totalorder %v204, 108
      %v207 = vsel %vm206, %v201, %v10
      %s208 = smul.addr %s189, 128
      %v209 = vlaneseq
      %v210 = vand.u32 %v209, 127
      %v211 = vstv %s208
      %v212 = vadd.s32 %v210, %v211
      %vm213 = vcmp.lt.s32.totalorder %v212, 392
      %v214 = vsel %vm213, %v207, %v10
      %v215 = vpack.c.bf16 0.0, %v214
      %217 = vst [vmem:[#allocation7] sm:$0xf] %v215
      %s218 = scalar_lea.vmem %s188, 4
      %s219 = sadd.s32 %s189, 1
      %s220 = ssub.s32 3, %s219
      %p221 = scmp.lt.s32.totalorder %s220, 0
      %s222 = scalar_select %p221, 0, 255
      %s223 = sshrl.u32 %s222, 1
      %s224 = sor.u32 %s222, %s223
      %s225 = sand.u32 %s224, 85
      %s226 = sshrl.u32 %s225, 1
      %s227 = sor.u32 %s225, %s226
      %s228 = sand.u32 51, %s227
      %s229 = sshrl.u32 %s228, 2
      %s230 = sor.u32 %s228, %s229
      %s231 = sand.u32 15, %s230
      %v232 = vld [vmem:[%s218] sm:%s231]
      %v233 = vunpack.c.l.bf16 %v232
      %v234 = vunpack.c.h.bf16 %v232
      %s235 = sadd.s32 %s189, 1
      %s236 = ssub.s32 3, %s235
      %v237 = vstv %s236
      %vm238 = vcmp.lt.s32.totalorder %v237, 0
      %v239 = vsel %vm238, %v10, %v233
      %v240 = vlaneseq
      %v241 = vshrl.u32 %v240, 7
      %vm243 = vcmp.lt.s32.totalorder %v241, 108
      %v244 = vsel %vm243, %v239, %v10
      %s245 = sadd.s32 %s189, 1
      %s246 = smul.addr %s245, 128
      %v247 = vlaneseq
      %v248 = vand.u32 %v247, 127
      %v249 = vstv %s246
      %v250 = vadd.s32 %v248, %v249
      %vm251 = vcmp.lt.s32.totalorder %v250, 392
      %v252 = vsel %vm251, %v244, %v10
      %s253 = scalar_lea.vmem [#allocation7], 4
      %v254 = vpack.c.bf16 0.0, %v252
      %256 = vst [vmem:[%s253] sm:$0xf] %v254
      %s257 = scalar_lea.vmem %s188, 16
      %v258 = vld [vmem:[%s257] sm:$0xf]
      %v259 = vunpack.c.l.bf16 %v258
      %v260 = vunpack.c.h.bf16 %v258
      %v261 = vlaneseq
      %v262 = vshrl.u32 %v261, 7
      %v263 = vadd.s32 %v262, 8
      %vm264 = vcmp.lt.s32.totalorder %v263, 108
      %v265 = vsel %vm264, %v259, %v10
      %s266 = smul.addr %s189, 128
      %v267 = vlaneseq
      %v268 = vand.u32 %v267, 127
      %v269 = vstv %s266
      %v270 = vadd.s32 %v268, %v269
      %vm271 = vcmp.lt.s32.totalorder %v270, 392
      %v272 = vsel %vm271, %v265, %v10
      %s273 = scalar_lea.vmem [#allocation7], 8
      %v274 = vpack.c.bf16 0.0, %v272
      %276 = vst [vmem:[%s273] sm:$0xf] %v274
      %s277 = scalar_lea.vmem %s188, 20
      %s278 = sadd.s32 %s189, 1
      %s279 = ssub.s32 3, %s278
      %p280 = scmp.lt.s32.totalorder %s279, 0
      %s281 = scalar_select %p280, 0, 255
      %s282 = sshrl.u32 %s281, 1
      %s283 = sor.u32 %s281, %s282
      %s284 = sand.u32 %s283, 85
      %s285 = sshrl.u32 %s284, 1
      %s286 = sor.u32 %s284, %s285
      %s287 = sand.u32 51, %s286
      %s288 = sshrl.u32 %s287, 2
      %s289 = sor.u32 %s287, %s288
      %s290 = sand.u32 15, %s289
      %v291 = vld [vmem:[%s277] sm:%s290]
      %v292 = vunpack.c.l.bf16 %v291
      %v293 = vunpack.c.h.bf16 %v291
      %s294 = sadd.s32 %s189, 1
      %s295 = ssub.s32 3, %s294
      %v296 = vstv %s295
      %vm297 = vcmp.lt.s32.totalorder %v296, 0
      %v298 = vsel %vm297, %v10, %v292
      %v299 = vlaneseq
      %v300 = vshrl.u32 %v299, 7
      %v301 = vadd.s32 %v300, 8
      %vm302 = vcmp.lt.s32.totalorder %v301, 108
      %v303 = vsel %vm302, %v298, %v10
      %s304 = sadd.s32 %s189, 1
      %s305 = smul.addr %s304, 128
      %v306 = vlaneseq
      %v307 = vand.u32 %v306, 127
      %v308 = vstv %s305
      %v309 = vadd.s32 %v307, %v308
      %vm310 = vcmp.lt.s32.totalorder %v309, 392
      %v311 = vsel %vm310, %v303, %v10
      %s312 = scalar_lea.vmem [#allocation7], 12
      %v313 = vpack.c.bf16 0.0, %v311
      %315 = vst [vmem:[%s312] sm:$0xf] %v313
      %s316 = scalar_lea.vmem %s188, 32
      %v317 = vld [vmem:[%s316] sm:$0xf]
      %v318 = vunpack.c.l.bf16 %v317
      %v319 = vunpack.c.h.bf16 %v317
      %v320 = vlaneseq
      %v321 = vshrl.u32 %v320, 7
      %v322 = vadd.s32 %v321, 16
      %vm323 = vcmp.lt.s32.totalorder %v322, 108
      %v324 = vsel %vm323, %v318, %v10
      %s325 = smul.addr %s189, 128
      %v326 = vlaneseq
      %v327 = vand.u32 %v326, 127
      %v328 = vstv %s325
      %v329 = vadd.s32 %v327, %v328
      %vm330 = vcmp.lt.s32.totalorder %v329, 392
      %v331 = vsel %vm330, %v324, %v10
      %s332 = scalar_lea.vmem [#allocation7], 16
      %v333 = vpack.c.bf16 0.0, %v331
      %335 = vst [vmem:[%s332] sm:$0xf] %v333
      %s336 = scalar_lea.vmem %s188, 36
      %s337 = sadd.s32 %s189, 1
      %s338 = ssub.s32 3, %s337
      %p339 = scmp.lt.s32.totalorder %s338, 0
      %s340 = scalar_select %p339, 0, 255
      %s341 = sshrl.u32 %s340, 1
      %s342 = sor.u32 %s340, %s341
      %s343 = sand.u32 %s342, 85
      %s344 = sshrl.u32 %s343, 1
      %s345 = sor.u32 %s343, %s344
      %s346 = sand.u32 51, %s345
      %s347 = sshrl.u32 %s346, 2
      %s348 = sor.u32 %s346, %s347
      %s349 = sand.u32 15, %s348
      %v350 = vld [vmem:[%s336] sm:%s349]
      %v351 = vunpack.c.l.bf16 %v350
      %v352 = vunpack.c.h.bf16 %v350
      %s353 = sadd.s32 %s189, 1
      %s354 = ssub.s32 3, %s353
      %v355 = vstv %s354
      %vm356 = vcmp.lt.s32.totalorder %v355, 0
      %v357 = vsel %vm356, %v10, %v351
      %v358 = vlaneseq
      %v359 = vshrl.u32 %v358, 7
      %v360 = vadd.s32 %v359, 16
      %vm361 = vcmp.lt.s32.totalorder %v360, 108
      %v362 = vsel %vm361, %v357, %v10
      %s363 = sadd.s32 %s189, 1
      %s364 = smul.addr %s363, 128
      %v365 = vlaneseq
      %v366 = vand.u32 %v365, 127
      %v367 = vstv %s364
      %v368 = vadd.s32 %v366, %v367
      %vm369 = vcmp.lt.s32.totalorder %v368, 392
      %v370 = vsel %vm369, %v362, %v10
      %s371 = scalar_lea.vmem [#allocation7], 20
      %v372 = vpack.c.bf16 0.0, %v370
      %374 = vst [vmem:[%s371] sm:$0xf] %v372
      %s375 = scalar_lea.vmem %s188, 48
      %v376 = vld [vmem:[%s375] sm:$0xf]
      %v377 = vunpack.c.l.bf16 %v376
      %v378 = vunpack.c.h.bf16 %v376
      %v379 = vlaneseq
      %v380 = vshrl.u32 %v379, 7
      %v381 = vadd.s32 %v380, 24
      %vm382 = vcmp.lt.s32.totalorder %v381, 108
      %v383 = vsel %vm382, %v377, %v10
      %s384 = smul.addr %s189, 128
      %v385 = vlaneseq
      %v386 = vand.u32 %v385, 127
      %v387 = vstv %s384
      %v388 = vadd.s32 %v386, %v387
      %vm389 = vcmp.lt.s32.totalorder %v388, 392
      %v390 = vsel %vm389, %v383, %v10
      %s391 = scalar_lea.vmem [#allocation7], 24
      %v392 = vpack.c.bf16 0.0, %v390
      %394 = vst [vmem:[%s391] sm:$0xf] %v392
      %s395 = scalar_lea.vmem %s188, 52
      %s396 = sadd.s32 %s189, 1
      %s397 = ssub.s32 3, %s396
      %p398 = scmp.lt.s32.totalorder %s397, 0
      %s399 = scalar_select %p398, 0, 255
      %s400 = sshrl.u32 %s399, 1
      %s401 = sor.u32 %s399, %s400
      %s402 = sand.u32 %s401, 85
      %s403 = sshrl.u32 %s402, 1
      %s404 = sor.u32 %s402, %s403
      %s405 = sand.u32 51, %s404
      %s406 = sshrl.u32 %s405, 2
      %s407 = sor.u32 %s405, %s406
      %s408 = sand.u32 15, %s407
      %v409 = vld [vmem:[%s395] sm:%s408]
      %v410 = vunpack.c.l.bf16 %v409
      %v411 = vunpack.c.h.bf16 %v409
      %s412 = sadd.s32 %s189, 1
      %s413 = ssub.s32 3, %s412
      %v414 = vstv %s413
      %vm415 = vcmp.lt.s32.totalorder %v414, 0
      %v416 = vsel %vm415, %v10, %v410
      %v417 = vlaneseq
      %v418 = vshrl.u32 %v417, 7
      %v419 = vadd.s32 %v418, 24
      %vm420 = vcmp.lt.s32.totalorder %v419, 108
      %v421 = vsel %vm420, %v416, %v10
      %s422 = sadd.s32 %s189, 1
      %s423 = smul.addr %s422, 128
      %v424 = vlaneseq
      %v425 = vand.u32 %v424, 127
      %v426 = vstv %s423
      %v427 = vadd.s32 %v425, %v426
      %vm428 = vcmp.lt.s32.totalorder %v427, 392
      %v429 = vsel %vm428, %v421, %v10
      %s430 = scalar_lea.vmem [#allocation7], 28
      %v431 = vpack.c.bf16 0.0, %v429
      %433 = vst [vmem:[%s430] sm:$0xf] %v431
      %s434 = scalar_lea.vmem %s188, 64
      %v435 = vld [vmem:[%s434] sm:$0xf]
      %v436 = vunpack.c.l.bf16 %v435
      %v437 = vunpack.c.h.bf16 %v435
      %v438 = vlaneseq
      %v439 = vshrl.u32 %v438, 7
      %v440 = vadd.s32 %v439, 32
      %vm441 = vcmp.lt.s32.totalorder %v440, 108
      %v442 = vsel %vm441, %v436, %v10
      %s443 = smul.addr %s189, 128
      %v444 = vlaneseq
      %v445 = vand.u32 %v444, 127
      %v446 = vstv %s443
      %v447 = vadd.s32 %v445, %v446
      %vm448 = vcmp.lt.s32.totalorder %v447, 392
      %v449 = vsel %vm448, %v442, %v10
      %s450 = scalar_lea.vmem [#allocation7], 32
      %v451 = vpack.c.bf16 0.0, %v449
      %453 = vst [vmem:[%s450] sm:$0xf] %v451
      %s454 = scalar_lea.vmem %s188, 68
      %s455 = sadd.s32 %s189, 1
      %s456 = ssub.s32 3, %s455
      %p457 = scmp.lt.s32.totalorder %s456, 0
      %s458 = scalar_select %p457, 0, 255
      %s459 = sshrl.u32 %s458, 1
      %s460 = sor.u32 %s458, %s459
      %s461 = sand.u32 %s460, 85
      %s462 = sshrl.u32 %s461, 1
      %s463 = sor.u32 %s461, %s462
      %s464 = sand.u32 51, %s463
      %s465 = sshrl.u32 %s464, 2
      %s466 = sor.u32 %s464, %s465
      %s467 = sand.u32 15, %s466
      %v468 = vld [vmem:[%s454] sm:%s467]
      %v469 = vunpack.c.l.bf16 %v468
      %v470 = vunpack.c.h.bf16 %v468
      %s471 = sadd.s32 %s189, 1
      %s472 = ssub.s32 3, %s471
      %v473 = vstv %s472
      %vm474 = vcmp.lt.s32.totalorder %v473, 0
      %v475 = vsel %vm474, %v10, %v469
      %v476 = vlaneseq
      %v477 = vshrl.u32 %v476, 7
      %v478 = vadd.s32 %v477, 32
      %vm479 = vcmp.lt.s32.totalorder %v478, 108
      %v480 = vsel %vm479, %v475, %v10
      %s481 = sadd.s32 %s189, 1
      %s482 = smul.addr %s481, 128
      %v483 = vlaneseq
      %v484 = vand.u32 %v483, 127
      %v485 = vstv %s482
      %v486 = vadd.s32 %v484, %v485
      %vm487 = vcmp.lt.s32.totalorder %v486, 392
      %v488 = vsel %vm487, %v480, %v10
      %s489 = scalar_lea.vmem [#allocation7], 36
      %v490 = vpack.c.bf16 0.0, %v488
      %492 = vst [vmem:[%s489] sm:$0xf] %v490
      %s493 = scalar_lea.vmem %s188, 80
      %v494 = vld [vmem:[%s493] sm:$0xf]
      %v495 = vunpack.c.l.bf16 %v494
      %v496 = vunpack.c.h.bf16 %v494
      %v497 = vlaneseq
      %v498 = vshrl.u32 %v497, 7
      %v499 = vadd.s32 %v498, 40
      %vm500 = vcmp.lt.s32.totalorder %v499, 108
      %v501 = vsel %vm500, %v495, %v10
      %s502 = smul.addr %s189, 128
      %v503 = vlaneseq
      %v504 = vand.u32 %v503, 127
      %v505 = vstv %s502
      %v506 = vadd.s32 %v504, %v505
      %vm507 = vcmp.lt.s32.totalorder %v506, 392
      %v508 = vsel %vm507, %v501, %v10
      %s509 = scalar_lea.vmem [#allocation7], 40
      %v510 = vpack.c.bf16 0.0, %v508
      %512 = vst [vmem:[%s509] sm:$0xf] %v510
      %s513 = scalar_lea.vmem %s188, 84
      %s514 = sadd.s32 %s189, 1
      %s515 = ssub.s32 3, %s514
      %p516 = scmp.lt.s32.totalorder %s515, 0
      %s517 = scalar_select %p516, 0, 255
      %s518 = sshrl.u32 %s517, 1
      %s519 = sor.u32 %s517, %s518
      %s520 = sand.u32 %s519, 85
      %s521 = sshrl.u32 %s520, 1
      %s522 = sor.u32 %s520, %s521
      %s523 = sand.u32 51, %s522
      %s524 = sshrl.u32 %s523, 2
      %s525 = sor.u32 %s523, %s524
      %s526 = sand.u32 15, %s525
      %v527 = vld [vmem:[%s513] sm:%s526]
      %v528 = vunpack.c.l.bf16 %v527
      %v529 = vunpack.c.h.bf16 %v527
      %s530 = sadd.s32 %s189, 1
      %s531 = ssub.s32 3, %s530
      %v532 = vstv %s531
      %vm533 = vcmp.lt.s32.totalorder %v532, 0
      %v534 = vsel %vm533, %v10, %v528
      %v535 = vlaneseq
      %v536 = vshrl.u32 %v535, 7
      %v537 = vadd.s32 %v536, 40
      %vm538 = vcmp.lt.s32.totalorder %v537, 108
      %v539 = vsel %vm538, %v534, %v10
      %s540 = sadd.s32 %s189, 1
      %s541 = smul.addr %s540, 128
      %v542 = vlaneseq
      %v543 = vand.u32 %v542, 127
      %v544 = vstv %s541
      %v545 = vadd.s32 %v543, %v544
      %vm546 = vcmp.lt.s32.totalorder %v545, 392
      %v547 = vsel %vm546, %v539, %v10
      %s548 = scalar_lea.vmem [#allocation7], 44
      %v549 = vpack.c.bf16 0.0, %v547
      %551 = vst [vmem:[%s548] sm:$0xf] %v549
      %s552 = scalar_lea.vmem %s188, 96
      %v553 = vld [vmem:[%s552] sm:$0xf]
      %v554 = vunpack.c.l.bf16 %v553
      %v555 = vunpack.c.h.bf16 %v553
      %v556 = vlaneseq
      %v557 = vshrl.u32 %v556, 7
      %v558 = vadd.s32 %v557, 48
      %vm559 = vcmp.lt.s32.totalorder %v558, 108
      %v560 = vsel %vm559, %v554, %v10
      %s561 = smul.addr %s189, 128
      %v562 = vlaneseq
      %v563 = vand.u32 %v562, 127
      %v564 = vstv %s561
      %v565 = vadd.s32 %v563, %v564
      %vm566 = vcmp.lt.s32.totalorder %v565, 392
      %v567 = vsel %vm566, %v560, %v10
      %s568 = scalar_lea.vmem [#allocation7], 48
      %v569 = vpack.c.bf16 0.0, %v567
      %571 = vst [vmem:[%s568] sm:$0xf] %v569
      %s572 = scalar_lea.vmem %s188, 100
      %s573 = sadd.s32 %s189, 1
      %s574 = ssub.s32 3, %s573
      %p575 = scmp.lt.s32.totalorder %s574, 0
      %s576 = scalar_select %p575, 0, 255
      %s577 = sshrl.u32 %s576, 1
      %s578 = sor.u32 %s576, %s577
      %s579 = sand.u32 %s578, 85
      %s580 = sshrl.u32 %s579, 1
      %s581 = sor.u32 %s579, %s580
      %s582 = sand.u32 51, %s581
      %s583 = sshrl.u32 %s582, 2
      %s584 = sor.u32 %s582, %s583
      %s585 = sand.u32 15, %s584
      %v586 = vld [vmem:[%s572] sm:%s585]
      %v587 = vunpack.c.l.bf16 %v586
      %v588 = vunpack.c.h.bf16 %v586
      %s589 = sadd.s32 %s189, 1
      %s590 = ssub.s32 3, %s589
      %v591 = vstv %s590
      %vm592 = vcmp.lt.s32.totalorder %v591, 0
      %v593 = vsel %vm592, %v10, %v587
      %v594 = vlaneseq
      %v595 = vshrl.u32 %v594, 7
      %v596 = vadd.s32 %v595, 48
      %vm597 = vcmp.lt.s32.totalorder %v596, 108
      %v598 = vsel %vm597, %v593, %v10
      %s599 = sadd.s32 %s189, 1
      %s600 = smul.addr %s599, 128
      %v601 = vlaneseq
      %v602 = vand.u32 %v601, 127
      %v603 = vstv %s600
      %v604 = vadd.s32 %v602, %v603
      %vm605 = vcmp.lt.s32.totalorder %v604, 392
      %v606 = vsel %vm605, %v598, %v10
      %s607 = scalar_lea.vmem [#allocation7], 52
      %v608 = vpack.c.bf16 0.0, %v606
      %610 = vst [vmem:[%s607] sm:$0xf] %v608
      %s611 = scalar_lea.vmem %s188, 112
      %v612 = vld [vmem:[%s611] sm:$0xf]
      %v613 = vunpack.c.l.bf16 %v612
      %v614 = vunpack.c.h.bf16 %v612
      %v615 = vlaneseq
      %v616 = vshrl.u32 %v615, 7
      %v617 = vadd.s32 %v616, 56
      %vm618 = vcmp.lt.s32.totalorder %v617, 108
      %v619 = vsel %vm618, %v613, %v10
      %s620 = smul.addr %s189, 128
      %v621 = vlaneseq
      %v622 = vand.u32 %v621, 127
      %v623 = vstv %s620
      %v624 = vadd.s32 %v622, %v623
      %vm625 = vcmp.lt.s32.totalorder %v624, 392
      %v626 = vsel %vm625, %v619, %v10
      %s627 = scalar_lea.vmem [#allocation7], 56
      %v628 = vpack.c.bf16 0.0, %v626
      %630 = vst [vmem:[%s627] sm:$0xf] %v628
      %s631 = scalar_lea.vmem %s188, 116
      %s632 = sadd.s32 %s189, 1
      %s633 = ssub.s32 3, %s632
      %p634 = scmp.lt.s32.totalorder %s633, 0
      %s635 = scalar_select %p634, 0, 255
      %s636 = sshrl.u32 %s635, 1
      %s637 = sor.u32 %s635, %s636
      %s638 = sand.u32 %s637, 85
      %s639 = sshrl.u32 %s638, 1
      %s640 = sor.u32 %s638, %s639
      %s641 = sand.u32 51, %s640
      %s642 = sshrl.u32 %s641, 2
      %s643 = sor.u32 %s641, %s642
      %s644 = sand.u32 15, %s643
      %v645 = vld [vmem:[%s631] sm:%s644]
      %v646 = vunpack.c.l.bf16 %v645
      %v647 = vunpack.c.h.bf16 %v645
      %s648 = sadd.s32 %s189, 1
      %s649 = ssub.s32 3, %s648
      %v650 = vstv %s649
      %vm651 = vcmp.lt.s32.totalorder %v650, 0
      %v652 = vsel %vm651, %v10, %v646
      %v653 = vlaneseq
      %v654 = vshrl.u32 %v653, 7
      %v655 = vadd.s32 %v654, 56
      %vm656 = vcmp.lt.s32.totalorder %v655, 108
      %v657 = vsel %vm656, %v652, %v10
      %s658 = sadd.s32 %s189, 1
      %s659 = smul.addr %s658, 128
      %v660 = vlaneseq
      %v661 = vand.u32 %v660, 127
      %v662 = vstv %s659
      %v663 = vadd.s32 %v661, %v662
      %vm664 = vcmp.lt.s32.totalorder %v663, 392
      %v665 = vsel %vm664, %v657, %v10
      %s666 = scalar_lea.vmem [#allocation7], 60
      %v667 = vpack.c.bf16 0.0, %v665
      %669 = vst [vmem:[%s666] sm:$0xf] %v667
      %s670 = scalar_lea.vmem %s188, 128
      %v671 = vld [vmem:[%s670] sm:$0xf]
      %v672 = vunpack.c.l.bf16 %v671
      %v673 = vunpack.c.h.bf16 %v671
      %v674 = vlaneseq
      %v675 = vshrl.u32 %v674, 7
      %v676 = vadd.s32 %v675, 64
      %vm677 = vcmp.lt.s32.totalorder %v676, 108
      %v678 = vsel %vm677, %v672, %v10
      %s679 = smul.addr %s189, 128
      %v680 = vlaneseq
      %v681 = vand.u32 %v680, 127
      %v682 = vstv %s679
      %v683 = vadd.s32 %v681, %v682
      %vm684 = vcmp.lt.s32.totalorder %v683, 392
      %v685 = vsel %vm684, %v678, %v10
      %s686 = scalar_lea.vmem [#allocation7], 64
      %v687 = vpack.c.bf16 0.0, %v685
      %689 = vst [vmem:[%s686] sm:$0xf] %v687
      %s690 = scalar_lea.vmem %s188, 132
      %s691 = sadd.s32 %s189, 1
      %s692 = ssub.s32 3, %s691
      %p693 = scmp.lt.s32.totalorder %s692, 0
      %s694 = scalar_select %p693, 0, 255
      %s695 = sshrl.u32 %s694, 1
      %s696 = sor.u32 %s694, %s695
      %s697 = sand.u32 %s696, 85
      %s698 = sshrl.u32 %s697, 1
      %s699 = sor.u32 %s697, %s698
      %s700 = sand.u32 51, %s699
      %s701 = sshrl.u32 %s700, 2
      %s702 = sor.u32 %s700, %s701
      %s703 = sand.u32 15, %s702
      %v704 = vld [vmem:[%s690] sm:%s703]
      %v705 = vunpack.c.l.bf16 %v704
      %v706 = vunpack.c.h.bf16 %v704
      %s707 = sadd.s32 %s189, 1
      %s708 = ssub.s32 3, %s707
      %v709 = vstv %s708
      %vm710 = vcmp.lt.s32.totalorder %v709, 0
      %v711 = vsel %vm710, %v10, %v705
      %v712 = vlaneseq
      %v713 = vshrl.u32 %v712, 7
      %v714 = vadd.s32 %v713, 64
      %vm715 = vcmp.lt.s32.totalorder %v714, 108
      %v716 = vsel %vm715, %v711, %v10
      %s717 = sadd.s32 %s189, 1
      %s718 = smul.addr %s717, 128
      %v719 = vlaneseq
      %v720 = vand.u32 %v719, 127
      %v721 = vstv %s718
      %v722 = vadd.s32 %v720, %v721
      %vm723 = vcmp.lt.s32.totalorder %v722, 392
      %v724 = vsel %vm723, %v716, %v10
      %s725 = scalar_lea.vmem [#allocation7], 68
      %v726 = vpack.c.bf16 0.0, %v724
      %728 = vst [vmem:[%s725] sm:$0xf] %v726
      %s729 = scalar_lea.vmem %s188, 144
      %v730 = vld [vmem:[%s729] sm:$0xf]
      %v731 = vunpack.c.l.bf16 %v730
      %v732 = vunpack.c.h.bf16 %v730
      %v733 = vlaneseq
      %v734 = vshrl.u32 %v733, 7
      %v735 = vadd.s32 %v734, 72
      %vm736 = vcmp.lt.s32.totalorder %v735, 108
      %v737 = vsel %vm736, %v731, %v10
      %s738 = smul.addr %s189, 128
      %v739 = vlaneseq
      %v740 = vand.u32 %v739, 127
      %v741 = vstv %s738
      %v742 = vadd.s32 %v740, %v741
      %vm743 = vcmp.lt.s32.totalorder %v742, 392
      %v744 = vsel %vm743, %v737, %v10
      %s745 = scalar_lea.vmem [#allocation7], 72
      %v746 = vpack.c.bf16 0.0, %v744
      %748 = vst [vmem:[%s745] sm:$0xf] %v746
      %s749 = scalar_lea.vmem %s188, 148
      %s750 = sadd.s32 %s189, 1
      %s751 = ssub.s32 3, %s750
      %p752 = scmp.lt.s32.totalorder %s751, 0
      %s753 = scalar_select %p752, 0, 255
      %s754 = sshrl.u32 %s753, 1
      %s755 = sor.u32 %s753, %s754
      %s756 = sand.u32 %s755, 85
      %s757 = sshrl.u32 %s756, 1
      %s758 = sor.u32 %s756, %s757
      %s759 = sand.u32 51, %s758
      %s760 = sshrl.u32 %s759, 2
      %s761 = sor.u32 %s759, %s760
      %s762 = sand.u32 15, %s761
      %v763 = vld [vmem:[%s749] sm:%s762]
      %v764 = vunpack.c.l.bf16 %v763
      %v765 = vunpack.c.h.bf16 %v763
      %s766 = sadd.s32 %s189, 1
      %s767 = ssub.s32 3, %s766
      %v768 = vstv %s767
      %vm769 = vcmp.lt.s32.totalorder %v768, 0
      %v770 = vsel %vm769, %v10, %v764
      %v771 = vlaneseq
      %v772 = vshrl.u32 %v771, 7
      %v773 = vadd.s32 %v772, 72
      %vm774 = vcmp.lt.s32.totalorder %v773, 108
      %v775 = vsel %vm774, %v770, %v10
      %s776 = sadd.s32 %s189, 1
      %s777 = smul.addr %s776, 128
      %v778 = vlaneseq
      %v779 = vand.u32 %v778, 127
      %v780 = vstv %s777
      %v781 = vadd.s32 %v779, %v780
      %vm782 = vcmp.lt.s32.totalorder %v781, 392
      %v783 = vsel %vm782, %v775, %v10
      %s784 = scalar_lea.vmem [#allocation7], 76
      %v785 = vpack.c.bf16 0.0, %v783
      %787 = vst [vmem:[%s784] sm:$0xf] %v785
      %s788 = scalar_lea.vmem %s188, 160
      %v789 = vld [vmem:[%s788] sm:$0xf]
      %v790 = vunpack.c.l.bf16 %v789
      %v791 = vunpack.c.h.bf16 %v789
      %v792 = vlaneseq
      %v793 = vshrl.u32 %v792, 7
      %v794 = vadd.s32 %v793, 80
      %vm795 = vcmp.lt.s32.totalorder %v794, 108
      %v796 = vsel %vm795, %v790, %v10
      %s797 = smul.addr %s189, 128
      %v798 = vlaneseq
      %v799 = vand.u32 %v798, 127
      %v800 = vstv %s797
      %v801 = vadd.s32 %v799, %v800
      %vm802 = vcmp.lt.s32.totalorder %v801, 392
      %v803 = vsel %vm802, %v796, %v10
      %s804 = scalar_lea.vmem [#allocation7], 80
      %v805 = vpack.c.bf16 0.0, %v803
      %807 = vst [vmem:[%s804] sm:$0xf] %v805
      %s808 = scalar_lea.vmem %s188, 164
      %s809 = sadd.s32 %s189, 1
      %s810 = ssub.s32 3, %s809
      %p811 = scmp.lt.s32.totalorder %s810, 0
      %s812 = scalar_select %p811, 0, 255
      %s813 = sshrl.u32 %s812, 1
      %s814 = sor.u32 %s812, %s813
      %s815 = sand.u32 %s814, 85
      %s816 = sshrl.u32 %s815, 1
      %s817 = sor.u32 %s815, %s816
      %s818 = sand.u32 51, %s817
      %s819 = sshrl.u32 %s818, 2
      %s820 = sor.u32 %s818, %s819
      %s821 = sand.u32 15, %s820
      %v822 = vld [vmem:[%s808] sm:%s821]
      %v823 = vunpack.c.l.bf16 %v822
      %v824 = vunpack.c.h.bf16 %v822
      %s825 = sadd.s32 %s189, 1
      %s826 = ssub.s32 3, %s825
      %v827 = vstv %s826
      %vm828 = vcmp.lt.s32.totalorder %v827, 0
      %v829 = vsel %vm828, %v10, %v823
      %v830 = vlaneseq
      %v831 = vshrl.u32 %v830, 7
      %v832 = vadd.s32 %v831, 80
      %vm833 = vcmp.lt.s32.totalorder %v832, 108
      %v834 = vsel %vm833, %v829, %v10
      %s835 = sadd.s32 %s189, 1
      %s836 = smul.addr %s835, 128
      %v837 = vlaneseq
      %v838 = vand.u32 %v837, 127
      %v839 = vstv %s836
      %v840 = vadd.s32 %v838, %v839
      %vm841 = vcmp.lt.s32.totalorder %v840, 392
      %v842 = vsel %vm841, %v834, %v10
      %s843 = scalar_lea.vmem [#allocation7], 84
      %v844 = vpack.c.bf16 0.0, %v842
      %846 = vst [vmem:[%s843] sm:$0xf] %v844
      %s847 = scalar_lea.vmem %s188, 176
      %v848 = vld [vmem:[%s847] sm:$0xf]
      %v849 = vunpack.c.l.bf16 %v848
      %v850 = vunpack.c.h.bf16 %v848
      %v851 = vlaneseq
      %v852 = vshrl.u32 %v851, 7
      %v853 = vadd.s32 %v852, 88
      %vm854 = vcmp.lt.s32.totalorder %v853, 108
      %v855 = vsel %vm854, %v849, %v10
      %s856 = smul.addr %s189, 128
      %v857 = vlaneseq
      %v858 = vand.u32 %v857, 127
      %v859 = vstv %s856
      %v860 = vadd.s32 %v858, %v859
      %vm861 = vcmp.lt.s32.totalorder %v860, 392
      %v862 = vsel %vm861, %v855, %v10
      %s863 = scalar_lea.vmem [#allocation7], 88
      %v864 = vpack.c.bf16 0.0, %v862
      %866 = vst [vmem:[%s863] sm:$0xf] %v864
      %s867 = scalar_lea.vmem %s188, 180
      %s868 = sadd.s32 %s189, 1
      %s869 = ssub.s32 3, %s868
      %p870 = scmp.lt.s32.totalorder %s869, 0
      %s871 = scalar_select %p870, 0, 255
      %s872 = sshrl.u32 %s871, 1
      %s873 = sor.u32 %s871, %s872
      %s874 = sand.u32 %s873, 85
      %s875 = sshrl.u32 %s874, 1
      %s876 = sor.u32 %s874, %s875
      %s877 = sand.u32 51, %s876
      %s878 = sshrl.u32 %s877, 2
      %s879 = sor.u32 %s877, %s878
      %s880 = sand.u32 15, %s879
      %v881 = vld [vmem:[%s867] sm:%s880]
      %v882 = vunpack.c.l.bf16 %v881
      %v883 = vunpack.c.h.bf16 %v881
      %s884 = sadd.s32 %s189, 1
      %s885 = ssub.s32 3, %s884
      %v886 = vstv %s885
      %vm887 = vcmp.lt.s32.totalorder %v886, 0
      %v888 = vsel %vm887, %v10, %v882
      %v889 = vlaneseq
      %v890 = vshrl.u32 %v889, 7
      %v891 = vadd.s32 %v890, 88
      %vm892 = vcmp.lt.s32.totalorder %v891, 108
      %v893 = vsel %vm892, %v888, %v10
      %s894 = sadd.s32 %s189, 1
      %s895 = smul.addr %s894, 128
      %v896 = vlaneseq
      %v897 = vand.u32 %v896, 127
      %v898 = vstv %s895
      %v899 = vadd.s32 %v897, %v898
      %vm900 = vcmp.lt.s32.totalorder %v899, 392
      %v901 = vsel %vm900, %v893, %v10
      %s902 = scalar_lea.vmem [#allocation7], 92
      %v903 = vpack.c.bf16 0.0, %v901
      %905 = vst [vmem:[%s902] sm:$0xf] %v903
      %s906 = scalar_lea.vmem %s188, 192
      %v907 = vld [vmem:[%s906] sm:$0xf]
      %v908 = vunpack.c.l.bf16 %v907
      %v909 = vunpack.c.h.bf16 %v907
      %v910 = vlaneseq
      %v911 = vshrl.u32 %v910, 7
      %v912 = vadd.s32 %v911, 96
      %vm913 = vcmp.lt.s32.totalorder %v912, 108
      %v914 = vsel %vm913, %v908, %v10
      %s915 = smul.addr %s189, 128
      %v916 = vlaneseq
      %v917 = vand.u32 %v916, 127
      %v918 = vstv %s915
      %v919 = vadd.s32 %v917, %v918
      %vm920 = vcmp.lt.s32.totalorder %v919, 392
      %v921 = vsel %vm920, %v914, %v10
      %s922 = scalar_lea.vmem [#allocation7], 96
      %v923 = vpack.c.bf16 0.0, %v921
      %925 = vst [vmem:[%s922] sm:$0xf] %v923
      %s926 = scalar_lea.vmem %s188, 196
      %s927 = sadd.s32 %s189, 1
      %s928 = ssub.s32 3, %s927
      %p929 = scmp.lt.s32.totalorder %s928, 0
      %s930 = scalar_select %p929, 0, 255
      %s931 = sshrl.u32 %s930, 1
      %s932 = sor.u32 %s930, %s931
      %s933 = sand.u32 %s932, 85
      %s934 = sshrl.u32 %s933, 1
      %s935 = sor.u32 %s933, %s934
      %s936 = sand.u32 51, %s935
      %s937 = sshrl.u32 %s936, 2
      %s938 = sor.u32 %s936, %s937
      %s939 = sand.u32 15, %s938
      %v940 = vld [vmem:[%s926] sm:%s939]
      %v941 = vunpack.c.l.bf16 %v940
      %v942 = vunpack.c.h.bf16 %v940
      %s943 = sadd.s32 %s189, 1
      %s944 = ssub.s32 3, %s943
      %v945 = vstv %s944
      %vm946 = vcmp.lt.s32.totalorder %v945, 0
      %v947 = vsel %vm946, %v10, %v941
      %v948 = vlaneseq
      %v949 = vshrl.u32 %v948, 7
      %v950 = vadd.s32 %v949, 96
      %vm951 = vcmp.lt.s32.totalorder %v950, 108
      %v952 = vsel %vm951, %v947, %v10
      %s953 = sadd.s32 %s189, 1
      %s954 = smul.addr %s953, 128
      %v955 = vlaneseq
      %v956 = vand.u32 %v955, 127
      %v957 = vstv %s954
      %v958 = vadd.s32 %v956, %v957
      %vm959 = vcmp.lt.s32.totalorder %v958, 392
      %v960 = vsel %vm959, %v952, %v10
      %s961 = scalar_lea.vmem [#allocation7], 100
      %v962 = vpack.c.bf16 0.0, %v960
      %964 = vst [vmem:[%s961] sm:$0xf] %v962
      %s965 = scalar_lea.vmem %s188, 208
      %v966 = vld [vmem:[%s965] sm:$0xf]
      %v967 = vunpack.c.l.bf16 %v966
      %v968 = vunpack.c.h.bf16 %v966
      %v969 = vlaneseq
      %v970 = vshrl.u32 %v969, 7
      %v971 = vadd.s32 %v970, 104
      %vm972 = vcmp.lt.s32.totalorder %v971, 108
      %v973 = vsel %vm972, %v967, %v10
      %s974 = smul.addr %s189, 128
      %v975 = vlaneseq
      %v976 = vand.u32 %v975, 127
      %v977 = vstv %s974
      %v978 = vadd.s32 %v976, %v977
      %vm979 = vcmp.lt.s32.totalorder %v978, 392
      %v980 = vsel %vm979, %v973, %v10
      %s981 = scalar_lea.vmem [#allocation7], 104
      %v982 = vpack.c.bf16 0.0, %v980
      %984 = vst [vmem:[%s981] sm:$0xf] %v982
      %s985 = scalar_lea.vmem %s188, 212
      %s986 = sadd.s32 %s189, 1
      %s987 = ssub.s32 3, %s986
      %p988 = scmp.lt.s32.totalorder %s987, 0
      %s989 = scalar_select %p988, 0, 255
      %s990 = sshrl.u32 %s989, 1
      %s991 = sor.u32 %s989, %s990
      %s992 = sand.u32 %s991, 85
      %s993 = sshrl.u32 %s992, 1
      %s994 = sor.u32 %s992, %s993
      %s995 = sand.u32 51, %s994
      %s996 = sshrl.u32 %s995, 2
      %s997 = sor.u32 %s995, %s996
      %s998 = sand.u32 15, %s997
      %v999 = vld [vmem:[%s985] sm:%s998]
      %v1000 = vunpack.c.l.bf16 %v999
      %v1001 = vunpack.c.h.bf16 %v999
      %s1002 = sadd.s32 %s189, 1
      %s1003 = ssub.s32 3, %s1002
      %v1004 = vstv %s1003
      %vm1005 = vcmp.lt.s32.totalorder %v1004, 0
      %v1006 = vsel %vm1005, %v10, %v1000
      %v1007 = vlaneseq
      %v1008 = vshrl.u32 %v1007, 7
      %v1009 = vadd.s32 %v1008, 104
      %vm1010 = vcmp.lt.s32.totalorder %v1009, 108
      %v1011 = vsel %vm1010, %v1006, %v10
      %s1012 = sadd.s32 %s189, 1
      %s1013 = smul.addr %s1012, 128
      %v1014 = vlaneseq
      %v1015 = vand.u32 %v1014, 127
      %v1016 = vstv %s1013
      %v1017 = vadd.s32 %v1015, %v1016
      %vm1018 = vcmp.lt.s32.totalorder %v1017, 392
      %v1019 = vsel %vm1018, %v1011, %v10
      %s1020 = scalar_lea.vmem [#allocation7], 108
      %v1021 = vpack.c.bf16 0.0, %v1019
      %1023 = vst [vmem:[%s1020] sm:$0xf] %v1021
      %v1025 = vld [vmem:[%s0] sm:$0xf]
      %v1026 = vld [vmem:[%s0 + $0x4] sm:$0xf]
      %v1027 = vld [vmem:[%s0 + $0x8] sm:$0xf]
      %v1028 = vld [vmem:[%s0 + $0xc] sm:$0xf]
      %v1029 = vld [vmem:[#allocation7] sm:$0xff]
      %v1030 = vld [vmem:[#allocation7 + $0x8] sm:$0xff]
      %v1031 = vld [vmem:[#allocation7 + $0x10] sm:$0xff]
      %v1032 = vld [vmem:[#allocation7 + $0x18] sm:$0xff]
      %v1033 = vld [vmem:[#allocation7 + $0x20] sm:$0xff]
      %v1034 = vld [vmem:[#allocation7 + $0x28] sm:$0xff]
      %v1035 = vld [vmem:[#allocation7 + $0x30] sm:$0xff]
      %v1036 = vld [vmem:[#allocation7 + $0x38] sm:$0xff]
      %v1037 = vld [vmem:[#allocation7 + $0x40] sm:$0xff]
      %v1038 = vld [vmem:[#allocation7 + $0x48] sm:$0xff]
      %v1039 = vld [vmem:[#allocation7 + $0x50] sm:$0xff]
      %v1040 = vld [vmem:[#allocation7 + $0x58] sm:$0xff]
      %v1041 = vld [vmem:[#allocation7 + $0x60] sm:$0xff]
      %v1042 = vld [vmem:[#allocation7 + $0x68] sm:$0x33]
      %v1047 = vunpack.c.l.b16 %v1025
      %v1048 = vunpack.c.l.b16 %v1026
      %v1049 = vunpack.c.l.b16 %v1027
      %v1050 = vunpack.c.l.b16 %v1028
      %v1051 = vpack.c.b16 %v1048, %v1047
      %v1052 = vpack.c.b16 %v1050, %v1049
      %v1067 = vunpack.c.l.b16 %v1029
      %v1068 = vunpack.c.h.b16 %v1029
      %v1069 = vunpack.c.l.b16 %v1030
      %v1070 = vunpack.c.h.b16 %v1030
      %v1071 = vunpack.c.l.b16 %v1031
      %v1072 = vunpack.c.h.b16 %v1031
      %v1073 = vunpack.c.l.b16 %v1032
      %v1074 = vunpack.c.h.b16 %v1032
      %v1075 = vunpack.c.l.b16 %v1033
      %v1076 = vunpack.c.h.b16 %v1033
      %v1077 = vunpack.c.l.b16 %v1034
      %v1078 = vunpack.c.h.b16 %v1034
      %v1079 = vunpack.c.l.b16 %v1035
      %v1080 = vunpack.c.h.b16 %v1035
      %v1081 = vunpack.c.l.b16 %v1036
      %v1082 = vunpack.c.h.b16 %v1036
      %v1083 = vunpack.c.l.b16 %v1037
      %v1084 = vunpack.c.h.b16 %v1037
      %v1085 = vunpack.c.l.b16 %v1038
      %v1086 = vunpack.c.h.b16 %v1038
      %v1087 = vunpack.c.l.b16 %v1039
      %v1088 = vunpack.c.h.b16 %v1039
      %v1089 = vunpack.c.l.b16 %v1040
      %v1090 = vunpack.c.h.b16 %v1040
      %v1091 = vunpack.c.l.b16 %v1041
      %v1092 = vunpack.c.h.b16 %v1041
      %v1093 = vunpack.c.l.b16 %v1042
      %v1094 = vunpack.c.h.b16 %v1042
      %v1095 = vpack.c.b16 %v1069, %v1067
      %v1096 = vpack.c.b16 %v1070, %v1068
      %v1097 = vpack.c.b16 %v1073, %v1071
      %v1098 = vpack.c.b16 %v1074, %v1072
      %v1099 = vpack.c.b16 %v1077, %v1075
      %v1100 = vpack.c.b16 %v1078, %v1076
      %v1101 = vpack.c.b16 %v1081, %v1079
      %v1102 = vpack.c.b16 %v1082, %v1080
      %v1103 = vpack.c.b16 %v1085, %v1083
      %v1104 = vpack.c.b16 %v1086, %v1084
      %v1105 = vpack.c.b16 %v1089, %v1087
      %v1106 = vpack.c.b16 %v1090, %v1088
      %v1107 = vpack.c.b16 %v1093, %v1091
      %v1108 = vpack.c.b16 %v1094, %v1092
      %vm1121 = vcmask 883712
      %v1123 = vsel %vm1121, %v1051, 0
      %v1126 = vsel %vm1121, %v1052, 0
      %vm1128 = vcmask 1045504
      %v1130 = vsel %vm1128, %v1107, 0
      %v1133 = vsel %vm1128, %v1108, 0
      %1135 = vmatprep.subr.bf16.mxu0 %v1096
      %1136 = vmatpush1.bf16.msra.mxu0 %v1095
      %1137 = vmatprep.subr.bf16.mxu0 %v1098
      %1138 = vmatpush1.bf16.msra.mxu0 %v1097
      %1139 = vmatprep.subr.bf16.mxu0 %v1100
      %1140 = vmatpush1.bf16.msra.mxu0 %v1099
      %1141 = vmatprep.subr.bf16.mxu0 %v1102
      %1142 = vmatpush1.bf16.msra.mxu0 %v1101
      %1143 = vmatprep.subr.bf16.mxu0 %v1104
      %1144 = vmatpush1.bf16.msra.mxu0 %v1103
      %1145 = vmatprep.subr.bf16.mxu0 %v1106
      %1146 = vmatpush1.bf16.msra.mxu0 %v1105
      %1147 = vmatprep.subr.bf16.mxu0 %v1133
      %1148 = vmatpush1.bf16.msra.mxu0 %v1130
      %1149 = vmatprep.subr.bf16.mxu0 0
      %1150 = vmatpush1.bf16.msra.mxu0 0
      %1151 = vmatprep.subr.bf16.mxu0 0
      %1152 = vmatpush1.bf16.msra.mxu0 0
      %1153 = vmatprep.subr.bf16.mxu0 0
      %1154 = vmatpush1.bf16.msra.mxu0 0
      %1155 = vmatprep.subr.bf16.mxu0 0
      %1156 = vmatpush1.bf16.msra.mxu0 0
      %1157 = vmatprep.subr.bf16.mxu0 0
      %1158 = vmatpush1.bf16.msra.mxu0 0
      %1159 = vmatprep.subr.bf16.mxu0 0
      %1160 = vmatpush1.bf16.msra.mxu0 0
      %1161 = vmatprep.subr.bf16.mxu0 0
      %1162 = vmatpush1.bf16.msra.mxu0 0
      %1163 = vmatprep.subr.bf16.mxu0 0
      %1164 = vmatpush1.bf16.msra.mxu0 0
      %1165 = vmatprep.subr.bf16.mxu0 0
      %1166 = vmatpush1.bf16.msra.mxu0 0
      %1167 = vmatprep.mubr.bf16.mxu0 0
      %1168 = vmatmul.mubr.bf16.gmra.mrb[0].mxu0 %v1123
      %v1169 = vpop.f32.mrb[0].mxu0
      %v1170 = vadd.f32 0.0, %v1169
      %v1171 = vpop.f32.mrb[0].mxu0
      %v1172 = vadd.f32 0.0, %v1171
      %v1173 = vpop.f32.mrb[0].mxu0
      %v1174 = vadd.f32 0.0, %v1173
      %v1175 = vpop.f32.mrb[0].mxu0
      %v1176 = vadd.f32 0.0, %v1175
      %1177 = vmatprep.mubr.bf16.mxu0 0
      %1178 = vmatmul.mubr.bf16.gmra.mrb[0].mxu0 %v1126
      %v1179 = vpop.f32.mrb[0].mxu0
      %v1180 = vadd.f32 0.0, %v1179
      %v1181 = vpop.f32.mrb[0].mxu0
      %v1182 = vadd.f32 0.0, %v1181
      %v1183 = vpop.f32.mrb[0].mxu0
      %v1184 = vadd.f32 0.0, %v1183
      %v1185 = vpop.f32.mrb[0].mxu0
      %v1186 = vadd.f32 0.0, %v1185
      %1187 = vdwg.mxu0
      %v1188 = vmax.f32 %v1170, %v1174
      %v1189 = vmax.f32 %v1172, %v1176
      %v1190 = vmax.f32 %v1180, %v1184
      %v1191 = vmax.f32 %v1182, %v1186
      %v1192 = vmax.f32 %v1188, %v1190
      %v1193 = vmax.f32 %v1189, %v1191
      %v1194 = vld [vmem:[%s1] sm:$0xff]
      %1196 = vset.pattern.permute.xlu0 0
      %1197 = vperm.xlu0 %1196, %v1194
      %v1198 = vpop.permute.xlu0 %1197
      %v1200 = vadd.f32 %v1192, %v1198
      %v1201 = vadd.f32 %v1193, %v1198
      %v1202 = vmax.f32 %v1200, 0.0
      %v1203 = vmax.f32 %v1201, 0.0
      %v1204 = vpack.c.bf16 %v1202, %v1202
      %v1205 = vpack.c.bf16 %v1203, %v1203
      %v1208 = vunpack.c.l.b16 %v1204
      %v1209 = vunpack.c.l.b16 %v1205
      %v1210 = vpack.c.b16 %v1209, %v1208
      %1212 = vst [vmem:[%s198] sm:$0xff] %v1210
      %s1213 = smul.u32 2, %s20
      %p1214 = scmp.lt.s32.totalorder %s1213, 3
      %s1215 = scalar_select %p1214, %s1213, 3
      %s1216 = smul.addr %s1215, 4
      %s1217 = scalar_lea.vmem %s4, %s1216
      // Predicated region
      $region33: #{net_forward.6} parent=31 // pred_check
        %p1218 = pneg %p106
      $region34: #{net_forward.6} parent=31 // pred_check_branch
        %1220 = sbr.rel (%p1218) target = $region36
      $region35: #{net_forward.6} parent=31 // pred_region
        %s1221 = smul.u32 2, %s20
      $region36: #{net_forward.6} parent=31 // pred_fallthru
        _
    $region32: #{net_forward.6} parent=5 // pred_fallthru
      _
    %p1222 = scmp.le.s32.totalorder 2, %s15
    // Predicated region
    $region37: #{net_forward.6} parent=5 // pred_check
      %p1223 = pneg %p1222
    $region38: #{net_forward.6} parent=5 // pred_check_branch
      %1225 = sbr.rel (%p1223) target = $region40
    $region39: #{net_forward.6} parent=5 // pred_region
      %s1226 = ssub.s32 %s15, 2
      // Predicated region
      $region41: #{net_forward.6} parent=39 // pred_check
        %p1227 = pneg %p112
      $region42: #{net_forward.6} parent=39 // pred_check_branch
        %1229 = sbr.rel (%p1227) target = $region44
      $region43: #{net_forward.6} parent=39 // pred_region
        %s1230 = smul.u32 2, %s21
        %p1231 = scmp.lt.s32.totalorder %s1230, 3
        %s1232 = scalar_select %p1231, %s1230, 3
        %s1233 = smul.addr %s1232, 4
        %s1234 = scalar_lea.vmem %s4, %s1233
      $region44: #{net_forward.6} parent=39 // pred_fallthru
        _
    $region40: #{net_forward.6} parent=5 // pred_fallthru
      _
  $region6: #{net_forward.6} parent=0 // loop_footer
    %s19 = sadd.s32 1, %s15
  $region7: #{net_forward.6} parent=0 // loop_footer_branch
    %14 = sbr.rel target = $region3
  $region8: #{net_forward.6} parent=0 // loop_exit
    _

// kernel: net_forward.7
$region0: #{net_forward.7}
  #allocation0 [shape = 'u32[]', space=smem, size = 0x4, offset = 0x4, fixed_abs, tag = 'smem constant byte address 0x4 - core index']
  #allocation1 [shape = 'u32[144,128]{1,0:T(1,128)}', space=vmem, size = 0x12000, scoped, tag = 'internal scratch']
  #allocation2 [shape = 'u32[2048]{0}', space=vmem, size = 0x2000, scoped, tag = 'scoped memory for net_forward.7']
  #allocation3 [shape = 'u32[2048]{0}', space=vmem, size = 0x2000, scoped, tag = 'scoped memory for net_forward.7']
  #allocation4 [shape = 'u32[2048]{0}', space=vmem, size = 0x2000, scoped, tag = 'scoped memory for net_forward.7']
  #allocation5 [shape = 'u32[2048]{0}', space=vmem, size = 0x2000, scoped, tag = 'scoped memory for net_forward.7']
  #allocation6 [shape = 'u32[2048]{0}', space=vmem, size = 0x2000, scoped, tag = 'scoped memory for net_forward.7']
  %s0 = inlined_call_operand.vmem [shape: bf16[64,216], index: 0, kind: input, shape index: {}]
  %s1 = inlined_call_operand.vmem [shape: f32[16,1], index: 1, kind: input, shape index: {}]
  %s2 = inlined_call_operand.vmem [shape: bf16[216,50], index: 2, kind: input, shape index: {}]
  %s3 = inlined_call_operand.<no memory space> [shape: bf16[], index: 3, kind: input, shape index: {}]
  %s4 = inlined_call_operand.vmem [shape: bf16[16,128], index: 4, kind: output, shape index: {}]
  %s5 = sld [smem:[#allocation0]]
  $region22: #{net_forward.7} parent=0
    _
  %s7 = ssub.s32 1, %s5
  %s8 = scalar_select 0, %s7, %s5
  %v9 = vstv %s3
  %v10 = vunpack.i.l.bf16 %v9
  %v12 = vunpack.i.h.bf16 %v9
  $region1: #{net_forward.7} parent=0
    #allocation7 [shape = 'u8[55296]{0}', space=vmem, size = 0xd800, dematerialized = true, scoped, tag = 'FusionAdapter Buffer %fusion.3 = bf16[216,128]{1,0:T(8,128)(2,1)} fusion(%param_2.145, %param_3.71), kind=kLoop, calls=%fused_computation.75.clone, metadata={op_name="jit(net_forward)/jit(_pad)/pad" stack_frame_id=20}']
    // Predicated region
    $region2: #{net_forward.7} parent=1 // pred_check
      _
    $region3: #{net_forward.7} parent=1 // pred_check_branch
      %15 = sbr.rel (0) target = $region5
    $region4: #{net_forward.7} parent=1 // pred_region
      _
    $region5: #{net_forward.7} parent=1 // pred_fallthru
      _
    // Predicated region
    $region6: #{net_forward.7} parent=1 // pred_check
      _
    $region7: #{net_forward.7} parent=1 // pred_check_branch
      %17 = sbr.rel (0) target = $region9
    $region8: #{net_forward.7} parent=1 // pred_region
      _
    $region9: #{net_forward.7} parent=1 // pred_fallthru
      _
    // Predicated region
    $region10: #{net_forward.7} parent=1 // pred_check
      _
    $region11: #{net_forward.7} parent=1 // pred_check_branch
      %19 = sbr.rel (0) target = $region13
    $region12: #{net_forward.7} parent=1 // pred_region
      _
    $region13: #{net_forward.7} parent=1 // pred_fallthru
      _
    %s21 = sor.u32 255, 127
    %s22 = sand.u32 %s21, 85
    %s23 = sshrl.u32 %s22, 1
    %s24 = sor.u32 %s22, %s23
    %s25 = sand.u32 51, %s24
    %s26 = sshrl.u32 %s25, 2
    %s27 = sor.u32 %s25, %s26
    %s28 = sand.u32 15, %s27
    %v29 = vld [vmem:[%s2] sm:%s28]
    %v30 = vunpack.c.l.bf16 %v29
    %v31 = vunpack.c.h.bf16 %v29
    %v32 = vlaneseq
    %v33 = vand.u32 %v32, 127
    %vm35 = vcmp.lt.s32.totalorder %v33, 50
    %v36 = vsel %vm35, %v30, %v10
    %v37 = vpack.c.bf16 0.0, %v36
    %39 = vst [vmem:[#allocation7] sm:$0xf] %v37
    %s40 = scalar_lea.vmem %s2, 4
    %s42 = sor.u32 255, 127
    %s43 = sand.u32 %s42, 85
    %s44 = sshrl.u32 %s43, 1
    %s45 = sor.u32 %s43, %s44
    %s46 = sand.u32 51, %s45
    %s47 = sshrl.u32 %s46, 2
    %s48 = sor.u32 %s46, %s47
    %s49 = sand.u32 15, %s48
    %v50 = vld [vmem:[%s40] sm:%s49]
    %v51 = vunpack.c.l.bf16 %v50
    %v52 = vunpack.c.h.bf16 %v50
    %v53 = vlaneseq
    %v54 = vand.u32 %v53, 127
    %vm56 = vcmp.lt.s32.totalorder %v54, 50
    %v57 = vsel %vm56, %v51, %v10
    %s58 = scalar_lea.vmem [#allocation7], 4
    %v59 = vpack.c.bf16 0.0, %v57
    %61 = vst [vmem:[%s58] sm:$0xf] %v59
    %s62 = scalar_lea.vmem %s2, 8
    %s64 = sor.u32 255, 127
    %s65 = sand.u32 %s64, 85
    %s66 = sshrl.u32 %s65, 1
    %s67 = sor.u32 %s65, %s66
    %s68 = sand.u32 51, %s67
    %s69 = sshrl.u32 %s68, 2
    %s70 = sor.u32 %s68, %s69
    %s71 = sand.u32 15, %s70
    %v72 = vld [vmem:[%s62] sm:%s71]
    %v73 = vunpack.c.l.bf16 %v72
    %v74 = vunpack.c.h.bf16 %v72
    %v75 = vlaneseq
    %v76 = vand.u32 %v75, 127
    %vm78 = vcmp.lt.s32.totalorder %v76, 50
    %v79 = vsel %vm78, %v73, %v10
    %s80 = scalar_lea.vmem [#allocation7], 8
    %v81 = vpack.c.bf16 0.0, %v79
    %83 = vst [vmem:[%s80] sm:$0xf] %v81
    %s84 = scalar_lea.vmem %s2, 12
    %s86 = sor.u32 255, 127
    %s87 = sand.u32 %s86, 85
    %s88 = sshrl.u32 %s87, 1
    %s89 = sor.u32 %s87, %s88
    %s90 = sand.u32 51, %s89
    %s91 = sshrl.u32 %s90, 2
    %s92 = sor.u32 %s90, %s91
    %s93 = sand.u32 15, %s92
    %v94 = vld [vmem:[%s84] sm:%s93]
    %v95 = vunpack.c.l.bf16 %v94
    %v96 = vunpack.c.h.bf16 %v94
    %v97 = vlaneseq
    %v98 = vand.u32 %v97, 127
    %vm100 = vcmp.lt.s32.totalorder %v98, 50
    %v101 = vsel %vm100, %v95, %v10
    %s102 = scalar_lea.vmem [#allocation7], 12
    %v103 = vpack.c.bf16 0.0, %v101
    %105 = vst [vmem:[%s102] sm:$0xf] %v103
    %s106 = scalar_lea.vmem %s2, 16
    %s108 = sor.u32 255, 127
    %s109 = sand.u32 %s108, 85
    %s110 = sshrl.u32 %s109, 1
    %s111 = sor.u32 %s109, %s110
    %s112 = sand.u32 51, %s111
    %s113 = sshrl.u32 %s112, 2
    %s114 = sor.u32 %s112, %s113
    %s115 = sand.u32 15, %s114
    %v116 = vld [vmem:[%s106] sm:%s115]
    %v117 = vunpack.c.l.bf16 %v116
    %v118 = vunpack.c.h.bf16 %v116
    %v119 = vlaneseq
    %v120 = vand.u32 %v119, 127
    %vm122 = vcmp.lt.s32.totalorder %v120, 50
    %v123 = vsel %vm122, %v117, %v10
    %s124 = scalar_lea.vmem [#allocation7], 16
    %v125 = vpack.c.bf16 0.0, %v123
    %127 = vst [vmem:[%s124] sm:$0xf] %v125
    %s128 = scalar_lea.vmem %s2, 20
    %s130 = sor.u32 255, 127
    %s131 = sand.u32 %s130, 85
    %s132 = sshrl.u32 %s131, 1
    %s133 = sor.u32 %s131, %s132
    %s134 = sand.u32 51, %s133
    %s135 = sshrl.u32 %s134, 2
    %s136 = sor.u32 %s134, %s135
    %s137 = sand.u32 15, %s136
    %v138 = vld [vmem:[%s128] sm:%s137]
    %v139 = vunpack.c.l.bf16 %v138
    %v140 = vunpack.c.h.bf16 %v138
    %v141 = vlaneseq
    %v142 = vand.u32 %v141, 127
    %vm144 = vcmp.lt.s32.totalorder %v142, 50
    %v145 = vsel %vm144, %v139, %v10
    %s146 = scalar_lea.vmem [#allocation7], 20
    %v147 = vpack.c.bf16 0.0, %v145
    %149 = vst [vmem:[%s146] sm:$0xf] %v147
    %s150 = scalar_lea.vmem %s2, 24
    %s152 = sor.u32 255, 127
    %s153 = sand.u32 %s152, 85
    %s154 = sshrl.u32 %s153, 1
    %s155 = sor.u32 %s153, %s154
    %s156 = sand.u32 51, %s155
    %s157 = sshrl.u32 %s156, 2
    %s158 = sor.u32 %s156, %s157
    %s159 = sand.u32 15, %s158
    %v160 = vld [vmem:[%s150] sm:%s159]
    %v161 = vunpack.c.l.bf16 %v160
    %v162 = vunpack.c.h.bf16 %v160
    %v163 = vlaneseq
    %v164 = vand.u32 %v163, 127
    %vm166 = vcmp.lt.s32.totalorder %v164, 50
    %v167 = vsel %vm166, %v161, %v10
    %s168 = scalar_lea.vmem [#allocation7], 24
    %v169 = vpack.c.bf16 0.0, %v167
    %171 = vst [vmem:[%s168] sm:$0xf] %v169
    %s172 = scalar_lea.vmem %s2, 28
    %s174 = sor.u32 255, 127
    %s175 = sand.u32 %s174, 85
    %s176 = sshrl.u32 %s175, 1
    %s177 = sor.u32 %s175, %s176
    %s178 = sand.u32 51, %s177
    %s179 = sshrl.u32 %s178, 2
    %s180 = sor.u32 %s178, %s179
    %s181 = sand.u32 15, %s180
    %v182 = vld [vmem:[%s172] sm:%s181]
    %v183 = vunpack.c.l.bf16 %v182
    %v184 = vunpack.c.h.bf16 %v182
    %v185 = vlaneseq
    %v186 = vand.u32 %v185, 127
    %vm188 = vcmp.lt.s32.totalorder %v186, 50
    %v189 = vsel %vm188, %v183, %v10
    %s190 = scalar_lea.vmem [#allocation7], 28
    %v191 = vpack.c.bf16 0.0, %v189
    %193 = vst [vmem:[%s190] sm:$0xf] %v191
    %s194 = scalar_lea.vmem %s2, 32
    %s196 = sor.u32 255, 127
    %s197 = sand.u32 %s196, 85
    %s198 = sshrl.u32 %s197, 1
    %s199 = sor.u32 %s197, %s198
    %s200 = sand.u32 51, %s199
    %s201 = sshrl.u32 %s200, 2
    %s202 = sor.u32 %s200, %s201
    %s203 = sand.u32 15, %s202
    %v204 = vld [vmem:[%s194] sm:%s203]
    %v205 = vunpack.c.l.bf16 %v204
    %v206 = vunpack.c.h.bf16 %v204
    %v207 = vlaneseq
    %v208 = vand.u32 %v207, 127
    %vm210 = vcmp.lt.s32.totalorder %v208, 50
    %v211 = vsel %vm210, %v205, %v10
    %s212 = scalar_lea.vmem [#allocation7], 32
    %v213 = vpack.c.bf16 0.0, %v211
    %215 = vst [vmem:[%s212] sm:$0xf] %v213
    %s216 = scalar_lea.vmem %s2, 36
    %s218 = sor.u32 255, 127
    %s219 = sand.u32 %s218, 85
    %s220 = sshrl.u32 %s219, 1
    %s221 = sor.u32 %s219, %s220
    %s222 = sand.u32 51, %s221
    %s223 = sshrl.u32 %s222, 2
    %s224 = sor.u32 %s222, %s223
    %s225 = sand.u32 15, %s224
    %v226 = vld [vmem:[%s216] sm:%s225]
    %v227 = vunpack.c.l.bf16 %v226
    %v228 = vunpack.c.h.bf16 %v226
    %v229 = vlaneseq
    %v230 = vand.u32 %v229, 127
    %vm232 = vcmp.lt.s32.totalorder %v230, 50
    %v233 = vsel %vm232, %v227, %v10
    %s234 = scalar_lea.vmem [#allocation7], 36
    %v235 = vpack.c.bf16 0.0, %v233
    %237 = vst [vmem:[%s234] sm:$0xf] %v235
    %s238 = scalar_lea.vmem %s2, 40
    %s240 = sor.u32 255, 127
    %s241 = sand.u32 %s240, 85
    %s242 = sshrl.u32 %s241, 1
    %s243 = sor.u32 %s241, %s242
    %s244 = sand.u32 51, %s243
    %s245 = sshrl.u32 %s244, 2
    %s246 = sor.u32 %s244, %s245
    %s247 = sand.u32 15, %s246
    %v248 = vld [vmem:[%s238] sm:%s247]
    %v249 = vunpack.c.l.bf16 %v248
    %v250 = vunpack.c.h.bf16 %v248
    %v251 = vlaneseq
    %v252 = vand.u32 %v251, 127
    %vm254 = vcmp.lt.s32.totalorder %v252, 50
    %v255 = vsel %vm254, %v249, %v10
    %s256 = scalar_lea.vmem [#allocation7], 40
    %v257 = vpack.c.bf16 0.0, %v255
    %259 = vst [vmem:[%s256] sm:$0xf] %v257
    %s260 = scalar_lea.vmem %s2, 44
    %s262 = sor.u32 255, 127
    %s263 = sand.u32 %s262, 85
    %s264 = sshrl.u32 %s263, 1
    %s265 = sor.u32 %s263, %s264
    %s266 = sand.u32 51, %s265
    %s267 = sshrl.u32 %s266, 2
    %s268 = sor.u32 %s266, %s267
    %s269 = sand.u32 15, %s268
    %v270 = vld [vmem:[%s260] sm:%s269]
    %v271 = vunpack.c.l.bf16 %v270
    %v272 = vunpack.c.h.bf16 %v270
    %v273 = vlaneseq
    %v274 = vand.u32 %v273, 127
    %vm276 = vcmp.lt.s32.totalorder %v274, 50
    %v277 = vsel %vm276, %v271, %v10
    %s278 = scalar_lea.vmem [#allocation7], 44
    %v279 = vpack.c.bf16 0.0, %v277
    %281 = vst [vmem:[%s278] sm:$0xf] %v279
    %s282 = scalar_lea.vmem %s2, 48
    %s284 = sor.u32 255, 127
    %s285 = sand.u32 %s284, 85
    %s286 = sshrl.u32 %s285, 1
    %s287 = sor.u32 %s285, %s286
    %s288 = sand.u32 51, %s287
    %s289 = sshrl.u32 %s288, 2
    %s290 = sor.u32 %s288, %s289
    %s291 = sand.u32 15, %s290
    %v292 = vld [vmem:[%s282] sm:%s291]
    %v293 = vunpack.c.l.bf16 %v292
    %v294 = vunpack.c.h.bf16 %v292
    %v295 = vlaneseq
    %v296 = vand.u32 %v295, 127
    %vm298 = vcmp.lt.s32.totalorder %v296, 50
    %v299 = vsel %vm298, %v293, %v10
    %s300 = scalar_lea.vmem [#allocation7], 48
    %v301 = vpack.c.bf16 0.0, %v299
    %303 = vst [vmem:[%s300] sm:$0xf] %v301
    %s304 = scalar_lea.vmem %s2, 52
    %s306 = sor.u32 255, 127
    %s307 = sand.u32 %s306, 85
    %s308 = sshrl.u32 %s307, 1
    %s309 = sor.u32 %s307, %s308
    %s310 = sand.u32 51, %s309
    %s311 = sshrl.u32 %s310, 2
    %s312 = sor.u32 %s310, %s311
    %s313 = sand.u32 15, %s312
    %v314 = vld [vmem:[%s304] sm:%s313]
    %v315 = vunpack.c.l.bf16 %v314
    %v316 = vunpack.c.h.bf16 %v314
    %v317 = vlaneseq
    %v318 = vand.u32 %v317, 127
    %vm320 = vcmp.lt.s32.totalorder %v318, 50
    %v321 = vsel %vm320, %v315, %v10
    %s322 = scalar_lea.vmem [#allocation7], 52
    %v323 = vpack.c.bf16 0.0, %v321
    %325 = vst [vmem:[%s322] sm:$0xf] %v323
    %s326 = scalar_lea.vmem %s2, 56
    %s328 = sor.u32 255, 127
    %s329 = sand.u32 %s328, 85
    %s330 = sshrl.u32 %s329, 1
    %s331 = sor.u32 %s329, %s330
    %s332 = sand.u32 51, %s331
    %s333 = sshrl.u32 %s332, 2
    %s334 = sor.u32 %s332, %s333
    %s335 = sand.u32 15, %s334
    %v336 = vld [vmem:[%s326] sm:%s335]
    %v337 = vunpack.c.l.bf16 %v336
    %v338 = vunpack.c.h.bf16 %v336
    %v339 = vlaneseq
    %v340 = vand.u32 %v339, 127
    %vm342 = vcmp.lt.s32.totalorder %v340, 50
    %v343 = vsel %vm342, %v337, %v10
    %s344 = scalar_lea.vmem [#allocation7], 56
    %v345 = vpack.c.bf16 0.0, %v343
    %347 = vst [vmem:[%s344] sm:$0xf] %v345
    %s348 = scalar_lea.vmem %s2, 60
    %s350 = sor.u32 255, 127
    %s351 = sand.u32 %s350, 85
    %s352 = sshrl.u32 %s351, 1
    %s353 = sor.u32 %s351, %s352
    %s354 = sand.u32 51, %s353
    %s355 = sshrl.u32 %s354, 2
    %s356 = sor.u32 %s354, %s355
    %s357 = sand.u32 15, %s356
    %v358 = vld [vmem:[%s348] sm:%s357]
    %v359 = vunpack.c.l.bf16 %v358
    %v360 = vunpack.c.h.bf16 %v358
    %v361 = vlaneseq
    %v362 = vand.u32 %v361, 127
    %vm364 = vcmp.lt.s32.totalorder %v362, 50
    %v365 = vsel %vm364, %v359, %v10
    %s366 = scalar_lea.vmem [#allocation7], 60
    %v367 = vpack.c.bf16 0.0, %v365
    %369 = vst [vmem:[%s366] sm:$0xf] %v367
    %s370 = scalar_lea.vmem %s2, 64
    %s372 = sor.u32 255, 127
    %s373 = sand.u32 %s372, 85
    %s374 = sshrl.u32 %s373, 1
    %s375 = sor.u32 %s373, %s374
    %s376 = sand.u32 51, %s375
    %s377 = sshrl.u32 %s376, 2
    %s378 = sor.u32 %s376, %s377
    %s379 = sand.u32 15, %s378
    %v380 = vld [vmem:[%s370] sm:%s379]
    %v381 = vunpack.c.l.bf16 %v380
    %v382 = vunpack.c.h.bf16 %v380
    %v383 = vlaneseq
    %v384 = vand.u32 %v383, 127
    %vm386 = vcmp.lt.s32.totalorder %v384, 50
    %v387 = vsel %vm386, %v381, %v10
    %s388 = scalar_lea.vmem [#allocation7], 64
    %v389 = vpack.c.bf16 0.0, %v387
    %391 = vst [vmem:[%s388] sm:$0xf] %v389
    %s392 = scalar_lea.vmem %s2, 68
    %s394 = sor.u32 255, 127
    %s395 = sand.u32 %s394, 85
    %s396 = sshrl.u32 %s395, 1
    %s397 = sor.u32 %s395, %s396
    %s398 = sand.u32 51, %s397
    %s399 = sshrl.u32 %s398, 2
    %s400 = sor.u32 %s398, %s399
    %s401 = sand.u32 15, %s400
    %v402 = vld [vmem:[%s392] sm:%s401]
    %v403 = vunpack.c.l.bf16 %v402
    %v404 = vunpack.c.h.bf16 %v402
    %v405 = vlaneseq
    %v406 = vand.u32 %v405, 127
    %vm408 = vcmp.lt.s32.totalorder %v406, 50
    %v409 = vsel %vm408, %v403, %v10
    %s410 = scalar_lea.vmem [#allocation7], 68
    %v411 = vpack.c.bf16 0.0, %v409
    %413 = vst [vmem:[%s410] sm:$0xf] %v411
    %s414 = scalar_lea.vmem %s2, 72
    %s416 = sor.u32 255, 127
    %s417 = sand.u32 %s416, 85
    %s418 = sshrl.u32 %s417, 1
    %s419 = sor.u32 %s417, %s418
    %s420 = sand.u32 51, %s419
    %s421 = sshrl.u32 %s420, 2
    %s422 = sor.u32 %s420, %s421
    %s423 = sand.u32 15, %s422
    %v424 = vld [vmem:[%s414] sm:%s423]
    %v425 = vunpack.c.l.bf16 %v424
    %v426 = vunpack.c.h.bf16 %v424
    %v427 = vlaneseq
    %v428 = vand.u32 %v427, 127
    %vm430 = vcmp.lt.s32.totalorder %v428, 50
    %v431 = vsel %vm430, %v425, %v10
    %s432 = scalar_lea.vmem [#allocation7], 72
    %v433 = vpack.c.bf16 0.0, %v431
    %435 = vst [vmem:[%s432] sm:$0xf] %v433
    %s436 = scalar_lea.vmem %s2, 76
    %s438 = sor.u32 255, 127
    %s439 = sand.u32 %s438, 85
    %s440 = sshrl.u32 %s439, 1
    %s441 = sor.u32 %s439, %s440
    %s442 = sand.u32 51, %s441
    %s443 = sshrl.u32 %s442, 2
    %s444 = sor.u32 %s442, %s443
    %s445 = sand.u32 15, %s444
    %v446 = vld [vmem:[%s436] sm:%s445]
    %v447 = vunpack.c.l.bf16 %v446
    %v448 = vunpack.c.h.bf16 %v446
    %v449 = vlaneseq
    %v450 = vand.u32 %v449, 127
    %vm452 = vcmp.lt.s32.totalorder %v450, 50
    %v453 = vsel %vm452, %v447, %v10
    %s454 = scalar_lea.vmem [#allocation7], 76
    %v455 = vpack.c.bf16 0.0, %v453
    %457 = vst [vmem:[%s454] sm:$0xf] %v455
    %s458 = scalar_lea.vmem %s2, 80
    %s460 = sor.u32 255, 127
    %s461 = sand.u32 %s460, 85
    %s462 = sshrl.u32 %s461, 1
    %s463 = sor.u32 %s461, %s462
    %s464 = sand.u32 51, %s463
    %s465 = sshrl.u32 %s464, 2
    %s466 = sor.u32 %s464, %s465
    %s467 = sand.u32 15, %s466
    %v468 = vld [vmem:[%s458] sm:%s467]
    %v469 = vunpack.c.l.bf16 %v468
    %v470 = vunpack.c.h.bf16 %v468
    %v471 = vlaneseq
    %v472 = vand.u32 %v471, 127
    %vm474 = vcmp.lt.s32.totalorder %v472, 50
    %v475 = vsel %vm474, %v469, %v10
    %s476 = scalar_lea.vmem [#allocation7], 80
    %v477 = vpack.c.bf16 0.0, %v475
    %479 = vst [vmem:[%s476] sm:$0xf] %v477
    %s480 = scalar_lea.vmem %s2, 84
    %s482 = sor.u32 255, 127
    %s483 = sand.u32 %s482, 85
    %s484 = sshrl.u32 %s483, 1
    %s485 = sor.u32 %s483, %s484
    %s486 = sand.u32 51, %s485
    %s487 = sshrl.u32 %s486, 2
    %s488 = sor.u32 %s486, %s487
    %s489 = sand.u32 15, %s488
    %v490 = vld [vmem:[%s480] sm:%s489]
    %v491 = vunpack.c.l.bf16 %v490
    %v492 = vunpack.c.h.bf16 %v490
    %v493 = vlaneseq
    %v494 = vand.u32 %v493, 127
    %vm496 = vcmp.lt.s32.totalorder %v494, 50
    %v497 = vsel %vm496, %v491, %v10
    %s498 = scalar_lea.vmem [#allocation7], 84
    %v499 = vpack.c.bf16 0.0, %v497
    %501 = vst [vmem:[%s498] sm:$0xf] %v499
    %s502 = scalar_lea.vmem %s2, 88
    %s504 = sor.u32 255, 127
    %s505 = sand.u32 %s504, 85
    %s506 = sshrl.u32 %s505, 1
    %s507 = sor.u32 %s505, %s506
    %s508 = sand.u32 51, %s507
    %s509 = sshrl.u32 %s508, 2
    %s510 = sor.u32 %s508, %s509
    %s511 = sand.u32 15, %s510
    %v512 = vld [vmem:[%s502] sm:%s511]
    %v513 = vunpack.c.l.bf16 %v512
    %v514 = vunpack.c.h.bf16 %v512
    %v515 = vlaneseq
    %v516 = vand.u32 %v515, 127
    %vm518 = vcmp.lt.s32.totalorder %v516, 50
    %v519 = vsel %vm518, %v513, %v10
    %s520 = scalar_lea.vmem [#allocation7], 88
    %v521 = vpack.c.bf16 0.0, %v519
    %523 = vst [vmem:[%s520] sm:$0xf] %v521
    %s524 = scalar_lea.vmem %s2, 92
    %s526 = sor.u32 255, 127
    %s527 = sand.u32 %s526, 85
    %s528 = sshrl.u32 %s527, 1
    %s529 = sor.u32 %s527, %s528
    %s530 = sand.u32 51, %s529
    %s531 = sshrl.u32 %s530, 2
    %s532 = sor.u32 %s530, %s531
    %s533 = sand.u32 15, %s532
    %v534 = vld [vmem:[%s524] sm:%s533]
    %v535 = vunpack.c.l.bf16 %v534
    %v536 = vunpack.c.h.bf16 %v534
    %v537 = vlaneseq
    %v538 = vand.u32 %v537, 127
    %vm540 = vcmp.lt.s32.totalorder %v538, 50
    %v541 = vsel %vm540, %v535, %v10
    %s542 = scalar_lea.vmem [#allocation7], 92
    %v543 = vpack.c.bf16 0.0, %v541
    %545 = vst [vmem:[%s542] sm:$0xf] %v543
    %s546 = scalar_lea.vmem %s2, 96
    %s548 = sor.u32 255, 127
    %s549 = sand.u32 %s548, 85
    %s550 = sshrl.u32 %s549, 1
    %s551 = sor.u32 %s549, %s550
    %s552 = sand.u32 51, %s551
    %s553 = sshrl.u32 %s552, 2
    %s554 = sor.u32 %s552, %s553
    %s555 = sand.u32 15, %s554
    %v556 = vld [vmem:[%s546] sm:%s555]
    %v557 = vunpack.c.l.bf16 %v556
    %v558 = vunpack.c.h.bf16 %v556
    %v559 = vlaneseq
    %v560 = vand.u32 %v559, 127
    %vm562 = vcmp.lt.s32.totalorder %v560, 50
    %v563 = vsel %vm562, %v557, %v10
    %s564 = scalar_lea.vmem [#allocation7], 96
    %v565 = vpack.c.bf16 0.0, %v563
    %567 = vst [vmem:[%s564] sm:$0xf] %v565
    %s568 = scalar_lea.vmem %s2, 100
    %s570 = sor.u32 255, 127
    %s571 = sand.u32 %s570, 85
    %s572 = sshrl.u32 %s571, 1
    %s573 = sor.u32 %s571, %s572
    %s574 = sand.u32 51, %s573
    %s575 = sshrl.u32 %s574, 2
    %s576 = sor.u32 %s574, %s575
    %s577 = sand.u32 15, %s576
    %v578 = vld [vmem:[%s568] sm:%s577]
    %v579 = vunpack.c.l.bf16 %v578
    %v580 = vunpack.c.h.bf16 %v578
    %v581 = vlaneseq
    %v582 = vand.u32 %v581, 127
    %vm584 = vcmp.lt.s32.totalorder %v582, 50
    %v585 = vsel %vm584, %v579, %v10
    %s586 = scalar_lea.vmem [#allocation7], 100
    %v587 = vpack.c.bf16 0.0, %v585
    %589 = vst [vmem:[%s586] sm:$0xf] %v587
    %s590 = scalar_lea.vmem %s2, 104
    %s592 = sor.u32 255, 127
    %s593 = sand.u32 %s592, 85
    %s594 = sshrl.u32 %s593, 1
    %s595 = sor.u32 %s593, %s594
    %s596 = sand.u32 51, %s595
    %s597 = sshrl.u32 %s596, 2
    %s598 = sor.u32 %s596, %s597
    %s599 = sand.u32 15, %s598
    %v600 = vld [vmem:[%s590] sm:%s599]
    %v601 = vunpack.c.l.bf16 %v600
    %v602 = vunpack.c.h.bf16 %v600
    %v603 = vlaneseq
    %v604 = vand.u32 %v603, 127
    %vm606 = vcmp.lt.s32.totalorder %v604, 50
    %v607 = vsel %vm606, %v601, %v10
    %s608 = scalar_lea.vmem [#allocation7], 104
    %v609 = vpack.c.bf16 0.0, %v607
    %611 = vst [vmem:[%s608] sm:$0xf] %v609
    %v613 = vld [vmem:[%s0] sm:$0xff]
    %v614 = vld [vmem:[%s0 + $0x8] sm:$0xff]
    %v615 = vld [vmem:[%s0 + $0x10] sm:$0xff]
    %v616 = vld [vmem:[%s0 + $0x18] sm:$0xff]
    %v617 = vld [vmem:[%s0 + $0x20] sm:$0xff]
    %v618 = vld [vmem:[%s0 + $0x28] sm:$0xff]
    %v619 = vld [vmem:[%s0 + $0x30] sm:$0xff]
    %v620 = vld [vmem:[%s0 + $0x38] sm:$0xff]
    %v621 = vld [vmem:[#allocation7] sm:$0xf]
    %v622 = vld [vmem:[#allocation7 + $0x4] sm:$0xf]
    %v623 = vld [vmem:[#allocation7 + $0x8] sm:$0xf]
    %v624 = vld [vmem:[#allocation7 + $0xc] sm:$0xf]
    %v625 = vld [vmem:[#allocation7 + $0x10] sm:$0xf]
    %v626 = vld [vmem:[#allocation7 + $0x14] sm:$0xf]
    %v627 = vld [vmem:[#allocation7 + $0x18] sm:$0xf]
    %v628 = vld [vmem:[#allocation7 + $0x1c] sm:$0xf]
    %v629 = vld [vmem:[#allocation7 + $0x20] sm:$0xf]
    %v630 = vld [vmem:[#allocation7 + $0x24] sm:$0xf]
    %v631 = vld [vmem:[#allocation7 + $0x28] sm:$0xf]
    %v632 = vld [vmem:[#allocation7 + $0x2c] sm:$0xf]
    %v633 = vld [vmem:[#allocation7 + $0x30] sm:$0xf]
    %v634 = vld [vmem:[#allocation7 + $0x34] sm:$0xf]
    %v635 = vld [vmem:[#allocation7 + $0x38] sm:$0xf]
    %v636 = vld [vmem:[#allocation7 + $0x3c] sm:$0xf]
    %v637 = vld [vmem:[#allocation7 + $0x40] sm:$0xf]
    %v638 = vld [vmem:[#allocation7 + $0x44] sm:$0xf]
    %v639 = vld [vmem:[#allocation7 + $0x48] sm:$0xf]
    %v640 = vld [vmem:[#allocation7 + $0x4c] sm:$0xf]
    %v641 = vld [vmem:[#allocation7 + $0x50] sm:$0xf]
    %v642 = vld [vmem:[#allocation7 + $0x54] sm:$0xf]
    %v643 = vld [vmem:[#allocation7 + $0x58] sm:$0xf]
    %v644 = vld [vmem:[#allocation7 + $0x5c] sm:$0xf]
    %v645 = vld [vmem:[#allocation7 + $0x60] sm:$0xf]
    %v646 = vld [vmem:[#allocation7 + $0x64] sm:$0xf]
    %v647 = vld [vmem:[#allocation7 + $0x68] sm:$0xf]
    %v656 = vunpack.c.l.b16 %v613
    %v657 = vunpack.c.h.b16 %v613
    %v658 = vunpack.c.l.b16 %v614
    %v659 = vunpack.c.h.b16 %v614
    %v660 = vunpack.c.l.b16 %v615
    %v661 = vunpack.c.h.b16 %v615
    %v662 = vunpack.c.l.b16 %v616
    %v663 = vunpack.c.h.b16 %v616
    %v664 = vunpack.c.l.b16 %v617
    %v665 = vunpack.c.h.b16 %v617
    %v666 = vunpack.c.l.b16 %v618
    %v667 = vunpack.c.h.b16 %v618
    %v668 = vunpack.c.l.b16 %v619
    %v669 = vunpack.c.h.b16 %v619
    %v670 = vunpack.c.l.b16 %v620
    %v671 = vunpack.c.h.b16 %v620
    %v672 = vpack.c.b16 %v658, %v656
    %v673 = vpack.c.b16 %v659, %v657
    %v674 = vpack.c.b16 %v662, %v660
    %v675 = vpack.c.b16 %v663, %v661
    %v676 = vpack.c.b16 %v666, %v664
    %v677 = vpack.c.b16 %v667, %v665
    %v678 = vpack.c.b16 %v670, %v668
    %v679 = vpack.c.b16 %v671, %v669
    %v711 = vunpack.c.l.b16 %v621
    %v712 = vunpack.c.l.b16 %v622
    %v713 = vunpack.c.l.b16 %v623
    %v714 = vunpack.c.l.b16 %v624
    %v715 = vunpack.c.l.b16 %v625
    %v716 = vunpack.c.l.b16 %v626
    %v717 = vunpack.c.l.b16 %v627
    %v718 = vunpack.c.l.b16 %v628
    %v719 = vunpack.c.l.b16 %v629
    %v720 = vunpack.c.l.b16 %v630
    %v721 = vunpack.c.l.b16 %v631
    %v722 = vunpack.c.l.b16 %v632
    %v723 = vunpack.c.l.b16 %v633
    %v724 = vunpack.c.l.b16 %v634
    %v725 = vunpack.c.l.b16 %v635
    %v726 = vunpack.c.l.b16 %v636
    %v727 = vunpack.c.l.b16 %v637
    %v728 = vunpack.c.l.b16 %v638
    %v729 = vunpack.c.l.b16 %v639
    %v730 = vunpack.c.l.b16 %v640
    %v731 = vunpack.c.l.b16 %v641
    %v732 = vunpack.c.l.b16 %v642
    %v733 = vunpack.c.l.b16 %v643
    %v734 = vunpack.c.l.b16 %v644
    %v735 = vunpack.c.l.b16 %v645
    %v736 = vunpack.c.l.b16 %v646
    %v737 = vunpack.c.l.b16 %v647
    %v738 = vpack.c.b16 %v712, %v711
    %v739 = vpack.c.b16 %v714, %v713
    %v740 = vpack.c.b16 %v716, %v715
    %v741 = vpack.c.b16 %v718, %v717
    %v742 = vpack.c.b16 %v720, %v719
    %v743 = vpack.c.b16 %v722, %v721
    %v744 = vpack.c.b16 %v724, %v723
    %v745 = vpack.c.b16 %v726, %v725
    %v746 = vpack.c.b16 %v728, %v727
    %v747 = vpack.c.b16 %v730, %v729
    %v748 = vpack.c.b16 %v732, %v731
    %v749 = vpack.c.b16 %v734, %v733
    %v750 = vpack.c.b16 %v736, %v735
    %v751 = vpack.c.b16 %v737, %v737
    %vm765 = vcmask 719872
    %v767 = vsel %vm765, %v673, 0
    %v770 = vsel %vm765, %v675, 0
    %v773 = vsel %vm765, %v677, 0
    %v776 = vsel %vm765, %v679, 0
    %vm778 = vcmask 1043456
    %v780 = vsel %vm778, %v751, 0
    %782 = vmatprep.subr.bf16.mxu0 0
    %783 = vmatpush1.bf16.msra.mxu0 %v738
    %784 = vmatprep.subr.bf16.mxu0 0
    %785 = vmatpush1.bf16.msra.mxu0 %v739
    %786 = vmatprep.subr.bf16.mxu0 0
    %787 = vmatpush1.bf16.msra.mxu0 %v740
    %788 = vmatprep.subr.bf16.mxu0 0
    %789 = vmatpush1.bf16.msra.mxu0 %v741
    %790 = vmatprep.subr.bf16.mxu0 0
    %791 = vmatpush1.bf16.msra.mxu0 %v742
    %792 = vmatprep.subr.bf16.mxu0 0
    %793 = vmatpush1.bf16.msra.mxu0 %v743
    %794 = vmatprep.subr.bf16.mxu0 0
    %795 = vmatpush1.bf16.msra.mxu0 %v744
    %796 = vmatprep.subr.bf16.mxu0 0
    %797 = vmatpush1.bf16.msra.mxu0 %v745
    %798 = vmatprep.subr.bf16.mxu0 0
    %799 = vmatpush1.bf16.msra.mxu0 %v746
    %800 = vmatprep.subr.bf16.mxu0 0
    %801 = vmatpush1.bf16.msra.mxu0 %v747
    %802 = vmatprep.subr.bf16.mxu0 0
    %803 = vmatpush1.bf16.msra.mxu0 %v748
    %804 = vmatprep.subr.bf16.mxu0 0
    %805 = vmatpush1.bf16.msra.mxu0 %v749
    %806 = vmatprep.subr.bf16.mxu0 0
    %807 = vmatpush1.bf16.msra.mxu0 %v750
    %808 = vmatprep.subr.bf16.mxu0 0
    %809 = vmatpush1.bf16.msra.mxu0 %v780
    %810 = vmatprep.subr.bf16.mxu0 0
    %811 = vmatpush1.bf16.msra.mxu0 0
    %812 = vmatprep.subr.bf16.mxu0 0
    %813 = vmatpush1.bf16.msra.mxu0 0
    %814 = vmatprep.mubr.bf16.mxu0 %v767
    %815 = vmatmul.mubr.bf16.gmra.mrb[0].mxu0 %v672
    %v816 = vpop.f32.mrb[0].mxu0
    %v817 = vadd.f32 0.0, %v816
    %v818 = vpop.f32.mrb[0].mxu0
    %v819 = vpop.f32.mrb[0].mxu0
    %v820 = vadd.f32 0.0, %v819
    %v821 = vpop.f32.mrb[0].mxu0
    %822 = vmatprep.mubr.bf16.mxu0 %v770
    %823 = vmatmul.mubr.bf16.gmra.mrb[0].mxu0 %v674
    %v824 = vpop.f32.mrb[0].mxu0
    %v825 = vadd.f32 0.0, %v824
    %v826 = vpop.f32.mrb[0].mxu0
    %v827 = vpop.f32.mrb[0].mxu0
    %v828 = vadd.f32 0.0, %v827
    %v829 = vpop.f32.mrb[0].mxu0
    %830 = vmatprep.mubr.bf16.mxu0 %v773
    %831 = vmatmul.mubr.bf16.gmra.mrb[0].mxu0 %v676
    %v832 = vpop.f32.mrb[0].mxu0
    %v833 = vadd.f32 0.0, %v832
    %v834 = vpop.f32.mrb[0].mxu0
    %v835 = vpop.f32.mrb[0].mxu0
    %v836 = vadd.f32 0.0, %v835
    %v837 = vpop.f32.mrb[0].mxu0
    %838 = vmatprep.mubr.bf16.mxu0 %v776
    %839 = vmatmul.mubr.bf16.gmra.mrb[0].mxu0 %v678
    %v840 = vpop.f32.mrb[0].mxu0
    %v841 = vadd.f32 0.0, %v840
    %v842 = vpop.f32.mrb[0].mxu0
    %v843 = vpop.f32.mrb[0].mxu0
    %v844 = vadd.f32 0.0, %v843
    %v845 = vpop.f32.mrb[0].mxu0
    %846 = vdwg.mxu0
    %v847 = vmax.f32 %v817, %v825
    %v848 = vmax.f32 %v820, %v828
    %v849 = vmax.f32 %v833, %v841
    %v850 = vmax.f32 %v836, %v844
    %v851 = vmax.f32 %v847, %v849
    %v852 = vmax.f32 %v848, %v850
    %v853 = vld [vmem:[%s1] sm:$0xff]
    %v854 = vld [vmem:[%s1 + $0x8] sm:$0xff]
    %856 = vset.pattern.permute.xlu0 0
    %857 = vperm.xlu0 %856, %v853
    %v858 = vpop.permute.xlu0 %857
    %861 = vset.pattern.permute.xlu0 0
    %862 = vperm.xlu0 %861, %v854
    %v863 = vpop.permute.xlu0 %862
    %v865 = vadd.f32 %v851, %v858
    %v866 = vadd.f32 %v852, %v863
    %v867 = vmax.f32 %v865, 0.0
    %v868 = vmax.f32 %v866, 0.0
    %v869 = vpack.c.bf16 %v868, %v867
    %v871 = vunpack.c.l.b16 %v869
    %v872 = vunpack.c.h.b16 %v869
    %v873 = vpack.c.b16 %v871, %v871
    %v874 = vpack.c.b16 %v872, %v872
    %877 = vst [vmem:[%s4] sm:$0xf] %v873
    %878 = vst [vmem:[%s4 + $0x4] sm:$0xf] %v874
    // Predicated region
    $region14: #{net_forward.7} parent=1 // pred_check
      _
    $region15: #{net_forward.7} parent=1 // pred_check_branch
      %880 = sbr.rel (0) target = $region17
    $region16: #{net_forward.7} parent=1 // pred_region
      _
    $region17: #{net_forward.7} parent=1 // pred_fallthru
      _
    // Predicated region
    $region18: #{net_forward.7} parent=1 // pred_check
      _
    $region19: #{net_forward.7} parent=1 // pred_check_branch
      %882 = sbr.rel (0) target = $region21
    $region20: #{net_forward.7} parent=1 // pred_region
      _
    $region21: #{net_forward.7} parent=1 // pred_fallthru
      _

// kernel: net_forward.5
$region0: #{net_forward.5}
  #allocation0 [shape = 'u32[]', space=smem, size = 0x4, offset = 0x4, fixed_abs, tag = 'smem constant byte address 0x4 - core index']
  #allocation1 [shape = 'u32[144,128]{1,0:T(1,128)}', space=vmem, size = 0x12000, scoped, tag = 'internal scratch']
  %s0 = inlined_call_operand.vmem [shape: bf16[400,2], index: 0, kind: input, shape index: {}]
  %s1 = inlined_call_operand.vmem [shape: bf16[120,400], index: 1, kind: input, shape index: {}]
  %s2 = inlined_call_operand.vmem [shape: f32[120,1], index: 2, kind: input, shape index: {}]
  %s3 = inlined_call_operand.vmem [shape: bf16[84,120], index: 3, kind: input, shape index: {}]
  %s4 = inlined_call_operand.vmem [shape: f32[84,1], index: 4, kind: input, shape index: {}]
  %s5 = inlined_call_operand.vmem [shape: bf16[10,84], index: 5, kind: input, shape index: {}]
  %s6 = inlined_call_operand.vmem [shape: f32[10,1], index: 6, kind: input, shape index: {}]
  %s7 = inlined_call_operand.vmem [shape: f32[10,2], index: 7, kind: output, shape index: {}]
  %s8 = sld [smem:[#allocation0]]
  $region38: #{net_forward.5} parent=0
    _
  %s10 = ssub.s32 1, %s8
  %s11 = scalar_select 0, %s10, %s8
  // Predicated region
  $region2: #{net_forward.5} parent=0 // pred_check
    _
  $region3: #{net_forward.5} parent=0 // pred_check_branch
    %13 = sbr.rel (0) target = $region5
  $region4: #{net_forward.5} parent=0 // pred_region
    _
  $region5: #{net_forward.5} parent=0 // pred_fallthru
    _
  // Predicated region
  $region6: #{net_forward.5} parent=0 // pred_check
    _
  $region7: #{net_forward.5} parent=0 // pred_check_branch
    %15 = sbr.rel (0) target = $region9
  $region8: #{net_forward.5} parent=0 // pred_region
    _
  $region9: #{net_forward.5} parent=0 // pred_fallthru
    _
  // Predicated region
  $region10: #{net_forward.5} parent=0 // pred_check
    _
  $region11: #{net_forward.5} parent=0 // pred_check_branch
    %17 = sbr.rel (0) target = $region13
  $region12: #{net_forward.5} parent=0 // pred_region
    _
  $region13: #{net_forward.5} parent=0 // pred_fallthru
    _
  // Predicated region
  $region14: #{net_forward.5} parent=0 // pred_check
    _
  $region15: #{net_forward.5} parent=0 // pred_check_branch
    %19 = sbr.rel (0) target = $region17
  $region16: #{net_forward.5} parent=0 // pred_region
    _
  $region17: #{net_forward.5} parent=0 // pred_fallthru
    _
  // Predicated region
  $region18: #{net_forward.5} parent=0 // pred_check
    _
  $region19: #{net_forward.5} parent=0 // pred_check_branch
    %21 = sbr.rel (0) target = $region21
  $region20: #{net_forward.5} parent=0 // pred_region
    _
  $region21: #{net_forward.5} parent=0 // pred_fallthru
    _
  // Predicated region
  $region22: #{net_forward.5} parent=0 // pred_check
    _
  $region23: #{net_forward.5} parent=0 // pred_check_branch
    %23 = sbr.rel (0) target = $region25
  $region24: #{net_forward.5} parent=0 // pred_region
    _
  $region25: #{net_forward.5} parent=0 // pred_fallthru
    _
  // Predicated region
  $region26: #{net_forward.5} parent=0 // pred_check
    _
  $region27: #{net_forward.5} parent=0 // pred_check_branch
    %25 = sbr.rel (0) target = $region29
  $region28: #{net_forward.5} parent=0 // pred_region
    _
  $region29: #{net_forward.5} parent=0 // pred_fallthru
    _
  %v27 = vld [vmem:[%s0] sm:$0xf]
  %v28 = vld [vmem:[%s0 + $0x4] sm:$0xf]
  %v29 = vld [vmem:[%s0 + $0x8] sm:$0xf]
  %v30 = vld [vmem:[%s0 + $0xc] sm:$0xf]
  %v31 = vld [vmem:[%s0 + $0x10] sm:$0xf]
  %v32 = vld [vmem:[%s0 + $0x14] sm:$0xf]
  %v33 = vld [vmem:[%s0 + $0x18] sm:$0xf]
  %v34 = vld [vmem:[%s0 + $0x1c] sm:$0xf]
  %v35 = vld [vmem:[%s0 + $0x20] sm:$0xf]
  %v36 = vld [vmem:[%s0 + $0x24] sm:$0xf]
  %v37 = vld [vmem:[%s0 + $0x28] sm:$0xf]
  %v38 = vld [vmem:[%s0 + $0x2c] sm:$0xf]
  %v39 = vld [vmem:[%s0 + $0x30] sm:$0xf]
  %v40 = vld [vmem:[%s0 + $0x34] sm:$0xf]
  %v41 = vld [vmem:[%s0 + $0x38] sm:$0xf]
  %v42 = vld [vmem:[%s0 + $0x3c] sm:$0xf]
  %v43 = vld [vmem:[%s0 + $0x40] sm:$0xf]
  %v44 = vld [vmem:[%s0 + $0x44] sm:$0xf]
  %v45 = vld [vmem:[%s0 + $0x48] sm:$0xf]
  %v46 = vld [vmem:[%s0 + $0x4c] sm:$0xf]
  %v47 = vld [vmem:[%s0 + $0x50] sm:$0xf]
  %v48 = vld [vmem:[%s0 + $0x54] sm:$0xf]
  %v49 = vld [vmem:[%s0 + $0x58] sm:$0xf]
  %v50 = vld [vmem:[%s0 + $0x5c] sm:$0xf]
  %v51 = vld [vmem:[%s0 + $0x60] sm:$0xf]
  %v52 = vld [vmem:[%s0 + $0x64] sm:$0xf]
  %v53 = vld [vmem:[%s0 + $0x68] sm:$0xf]
  %v54 = vld [vmem:[%s0 + $0x6c] sm:$0xf]
  %v55 = vld [vmem:[%s0 + $0x70] sm:$0xf]
  %v56 = vld [vmem:[%s0 + $0x74] sm:$0xf]
  %v57 = vld [vmem:[%s0 + $0x78] sm:$0xf]
  %v58 = vld [vmem:[%s0 + $0x7c] sm:$0xf]
  %v59 = vld [vmem:[%s0 + $0x80] sm:$0xf]
  %v60 = vld [vmem:[%s0 + $0x84] sm:$0xf]
  %v61 = vld [vmem:[%s0 + $0x88] sm:$0xf]
  %v62 = vld [vmem:[%s0 + $0x8c] sm:$0xf]
  %v63 = vld [vmem:[%s0 + $0x90] sm:$0xf]
  %v64 = vld [vmem:[%s0 + $0x94] sm:$0xf]
  %v65 = vld [vmem:[%s0 + $0x98] sm:$0xf]
  %v66 = vld [vmem:[%s0 + $0x9c] sm:$0xf]
  %v67 = vld [vmem:[%s0 + $0xa0] sm:$0xf]
  %v68 = vld [vmem:[%s0 + $0xa4] sm:$0xf]
  %v69 = vld [vmem:[%s0 + $0xa8] sm:$0xf]
  %v70 = vld [vmem:[%s0 + $0xac] sm:$0xf]
  %v71 = vld [vmem:[%s0 + $0xb0] sm:$0xf]
  %v72 = vld [vmem:[%s0 + $0xb4] sm:$0xf]
  %v73 = vld [vmem:[%s0 + $0xb8] sm:$0xf]
  %v74 = vld [vmem:[%s0 + $0xbc] sm:$0xf]
  %v75 = vld [vmem:[%s0 + $0xc0] sm:$0xf]
  %v76 = vld [vmem:[%s0 + $0xc4] sm:$0xf]
  %v77 = vld [vmem:[%s1] sm:$0xff]
  %v78 = vld [vmem:[%s1 + $0x8] sm:$0xff]
  %v79 = vld [vmem:[%s1 + $0x10] sm:$0xff]
  %v80 = vld [vmem:[%s1 + $0x18] sm:$0xff]
  %v81 = vld [vmem:[%s1 + $0x20] sm:$0xff]
  %v82 = vld [vmem:[%s1 + $0x28] sm:$0xff]
  %v83 = vld [vmem:[%s1 + $0x30] sm:$0xff]
  %v84 = vld [vmem:[%s1 + $0x38] sm:$0xff]
  %v85 = vld [vmem:[%s1 + $0x40] sm:$0xff]
  %v86 = vld [vmem:[%s1 + $0x48] sm:$0xff]
  %v87 = vld [vmem:[%s1 + $0x50] sm:$0xff]
  %v88 = vld [vmem:[%s1 + $0x58] sm:$0xff]
  %v89 = vld [vmem:[%s1 + $0x60] sm:$0xff]
  %v90 = vld [vmem:[%s1 + $0x68] sm:$0xff]
  %v91 = vld [vmem:[%s1 + $0x70] sm:$0xff]
  %v92 = vld [vmem:[%s1 + $0x78] sm:$0xff]
  %v93 = vld [vmem:[%s1 + $0x80] sm:$0xff]
  %v94 = vld [vmem:[%s1 + $0x88] sm:$0xff]
  %v95 = vld [vmem:[%s1 + $0x90] sm:$0xff]
  %v96 = vld [vmem:[%s1 + $0x98] sm:$0xff]
  %v97 = vld [vmem:[%s1 + $0xa0] sm:$0xff]
  %v98 = vld [vmem:[%s1 + $0xa8] sm:$0xff]
  %v99 = vld [vmem:[%s1 + $0xb0] sm:$0xff]
  %v100 = vld [vmem:[%s1 + $0xb8] sm:$0xff]
  %v101 = vld [vmem:[%s1 + $0xc0] sm:$0xff]
  %v102 = vld [vmem:[%s1 + $0xc8] sm:$0xff]
  %v103 = vld [vmem:[%s1 + $0xd0] sm:$0xff]
  %v104 = vld [vmem:[%s1 + $0xd8] sm:$0xff]
  %v105 = vld [vmem:[%s1 + $0xe0] sm:$0xff]
  %v106 = vld [vmem:[%s1 + $0xe8] sm:$0xff]
  %v107 = vld [vmem:[%s2] sm:$0xff]
  %v108 = vld [vmem:[%s2 + $0x8] sm:$0xff]
  %v109 = vld [vmem:[%s2 + $0x10] sm:$0xff]
  %v110 = vld [vmem:[%s2 + $0x18] sm:$0xff]
  %v111 = vld [vmem:[%s2 + $0x20] sm:$0xff]
  %v112 = vld [vmem:[%s2 + $0x28] sm:$0xff]
  %v113 = vld [vmem:[%s2 + $0x30] sm:$0xff]
  %v114 = vld [vmem:[%s2 + $0x38] sm:$0xff]
  %v115 = vld [vmem:[%s2 + $0x40] sm:$0xff]
  %v116 = vld [vmem:[%s2 + $0x48] sm:$0xff]
  %v117 = vld [vmem:[%s2 + $0x50] sm:$0xff]
  %v118 = vld [vmem:[%s2 + $0x58] sm:$0xff]
  %v119 = vld [vmem:[%s2 + $0x60] sm:$0xff]
  %v120 = vld [vmem:[%s2 + $0x68] sm:$0xff]
  %v121 = vld [vmem:[%s2 + $0x70] sm:$0xff]
  %123 = vset.pattern.permute.xlu0 0
  %124 = vperm.xlu0 %123, %v107
  %v125 = vpop.permute.xlu0 %124
  %128 = vset.pattern.permute.xlu0 0
  %129 = vperm.xlu0 %128, %v108
  %v130 = vpop.permute.xlu0 %129
  %133 = vset.pattern.permute.xlu0 0
  %134 = vperm.xlu0 %133, %v109
  %v135 = vpop.permute.xlu0 %134
  %138 = vset.pattern.permute.xlu0 0
  %139 = vperm.xlu0 %138, %v110
  %v140 = vpop.permute.xlu0 %139
  %143 = vset.pattern.permute.xlu0 0
  %144 = vperm.xlu0 %143, %v111
  %v145 = vpop.permute.xlu0 %144
  %148 = vset.pattern.permute.xlu0 0
  %149 = vperm.xlu0 %148, %v112
  %v150 = vpop.permute.xlu0 %149
  %153 = vset.pattern.permute.xlu0 0
  %154 = vperm.xlu0 %153, %v113
  %v155 = vpop.permute.xlu0 %154
  %158 = vset.pattern.permute.xlu0 0
  %159 = vperm.xlu0 %158, %v114
  %v160 = vpop.permute.xlu0 %159
  %163 = vset.pattern.permute.xlu0 0
  %164 = vperm.xlu0 %163, %v115
  %v165 = vpop.permute.xlu0 %164
  %168 = vset.pattern.permute.xlu0 0
  %169 = vperm.xlu0 %168, %v116
  %v170 = vpop.permute.xlu0 %169
  %173 = vset.pattern.permute.xlu0 0
  %174 = vperm.xlu0 %173, %v117
  %v175 = vpop.permute.xlu0 %174
  %178 = vset.pattern.permute.xlu0 0
  %179 = vperm.xlu0 %178, %v118
  %v180 = vpop.permute.xlu0 %179
  %183 = vset.pattern.permute.xlu0 0
  %184 = vperm.xlu0 %183, %v119
  %v185 = vpop.permute.xlu0 %184
  %188 = vset.pattern.permute.xlu0 0
  %189 = vperm.xlu0 %188, %v120
  %v190 = vpop.permute.xlu0 %189
  %193 = vset.pattern.permute.xlu0 0
  %194 = vperm.xlu0 %193, %v121
  %v195 = vpop.permute.xlu0 %194
  %v227 = vunpack.c.l.b16 %v77
  %v228 = vunpack.c.h.b16 %v77
  %v229 = vunpack.c.l.b16 %v78
  %v230 = vunpack.c.h.b16 %v78
  %v231 = vunpack.c.l.b16 %v79
  %v232 = vunpack.c.h.b16 %v79
  %v233 = vunpack.c.l.b16 %v80
  %v234 = vunpack.c.h.b16 %v80
  %v235 = vunpack.c.l.b16 %v81
  %v236 = vunpack.c.h.b16 %v81
  %v237 = vunpack.c.l.b16 %v82
  %v238 = vunpack.c.h.b16 %v82
  %v239 = vunpack.c.l.b16 %v83
  %v240 = vunpack.c.h.b16 %v83
  %v241 = vunpack.c.l.b16 %v84
  %v242 = vunpack.c.h.b16 %v84
  %v243 = vunpack.c.l.b16 %v85
  %v244 = vunpack.c.h.b16 %v85
  %v245 = vunpack.c.l.b16 %v86
  %v246 = vunpack.c.h.b16 %v86
  %v247 = vunpack.c.l.b16 %v87
  %v248 = vunpack.c.h.b16 %v87
  %v249 = vunpack.c.l.b16 %v88
  %v250 = vunpack.c.h.b16 %v88
  %v251 = vunpack.c.l.b16 %v89
  %v252 = vunpack.c.h.b16 %v89
  %v253 = vunpack.c.l.b16 %v90
  %v254 = vunpack.c.h.b16 %v90
  %v255 = vunpack.c.l.b16 %v91
  %v256 = vunpack.c.h.b16 %v91
  %v257 = vunpack.c.l.b16 %v92
  %v258 = vunpack.c.h.b16 %v92
  %v259 = vunpack.c.l.b16 %v93
  %v260 = vunpack.c.h.b16 %v93
  %v261 = vunpack.c.l.b16 %v94
  %v262 = vunpack.c.h.b16 %v94
  %v263 = vunpack.c.l.b16 %v95
  %v264 = vunpack.c.h.b16 %v95
  %v265 = vunpack.c.l.b16 %v96
  %v266 = vunpack.c.h.b16 %v96
  %v267 = vunpack.c.l.b16 %v97
  %v268 = vunpack.c.h.b16 %v97
  %v269 = vunpack.c.l.b16 %v98
  %v270 = vunpack.c.h.b16 %v98
  %v271 = vunpack.c.l.b16 %v99
  %v272 = vunpack.c.h.b16 %v99
  %v273 = vunpack.c.l.b16 %v100
  %v274 = vunpack.c.h.b16 %v100
  %v275 = vunpack.c.l.b16 %v101
  %v276 = vunpack.c.h.b16 %v101
  %v277 = vunpack.c.l.b16 %v102
  %v278 = vunpack.c.h.b16 %v102
  %v279 = vunpack.c.l.b16 %v103
  %v280 = vunpack.c.h.b16 %v103
  %v281 = vunpack.c.l.b16 %v104
  %v282 = vunpack.c.h.b16 %v104
  %v283 = vunpack.c.l.b16 %v105
  %v284 = vunpack.c.h.b16 %v105
  %v285 = vunpack.c.l.b16 %v106
  %v286 = vunpack.c.h.b16 %v106
  %v287 = vpack.c.b16 %v231, %v227
  %v288 = vpack.c.b16 %v232, %v228
  %v289 = vpack.c.b16 %v233, %v229
  %v290 = vpack.c.b16 %v234, %v230
  %v291 = vpack.c.b16 %v239, %v235
  %v292 = vpack.c.b16 %v240, %v236
  %v293 = vpack.c.b16 %v241, %v237
  %v294 = vpack.c.b16 %v242, %v238
  %v295 = vpack.c.b16 %v247, %v243
  %v296 = vpack.c.b16 %v248, %v244
  %v297 = vpack.c.b16 %v249, %v245
  %v298 = vpack.c.b16 %v250, %v246
  %v299 = vpack.c.b16 %v255, %v251
  %v300 = vpack.c.b16 %v256, %v252
  %v301 = vpack.c.b16 %v257, %v253
  %v302 = vpack.c.b16 %v258, %v254
  %v303 = vpack.c.b16 %v263, %v259
  %v304 = vpack.c.b16 %v264, %v260
  %v305 = vpack.c.b16 %v265, %v261
  %v306 = vpack.c.b16 %v266, %v262
  %v307 = vpack.c.b16 %v271, %v267
  %v308 = vpack.c.b16 %v272, %v268
  %v309 = vpack.c.b16 %v273, %v269
  %v310 = vpack.c.b16 %v274, %v270
  %v311 = vpack.c.b16 %v279, %v275
  %v312 = vpack.c.b16 %v280, %v276
  %v313 = vpack.c.b16 %v281, %v277
  %v314 = vpack.c.b16 %v282, %v278
  %v315 = vpack.c.b16 %v283, %v283
  %v316 = vpack.c.b16 %v284, %v284
  %v317 = vpack.c.b16 %v285, %v285
  %v318 = vpack.c.b16 %v286, %v286
  %v393 = vunpack.c.l.b16 %v27
  %v394 = vunpack.c.l.b16 %v28
  %v395 = vunpack.c.l.b16 %v29
  %v396 = vunpack.c.l.b16 %v30
  %v397 = vunpack.c.l.b16 %v31
  %v398 = vunpack.c.l.b16 %v32
  %v399 = vunpack.c.l.b16 %v33
  %v400 = vunpack.c.l.b16 %v34
  %v401 = vunpack.c.l.b16 %v35
  %v402 = vunpack.c.l.b16 %v36
  %v403 = vunpack.c.l.b16 %v37
  %v404 = vunpack.c.l.b16 %v38
  %v405 = vunpack.c.l.b16 %v39
  %v406 = vunpack.c.l.b16 %v40
  %v407 = vunpack.c.l.b16 %v41
  %v408 = vunpack.c.l.b16 %v42
  %v409 = vunpack.c.l.b16 %v43
  %v410 = vunpack.c.l.b16 %v44
  %v411 = vunpack.c.l.b16 %v45
  %v412 = vunpack.c.l.b16 %v46
  %v413 = vunpack.c.l.b16 %v47
  %v414 = vunpack.c.l.b16 %v48
  %v415 = vunpack.c.l.b16 %v49
  %v416 = vunpack.c.l.b16 %v50
  %v417 = vunpack.c.l.b16 %v51
  %v418 = vunpack.c.l.b16 %v52
  %v419 = vunpack.c.l.b16 %v53
  %v420 = vunpack.c.l.b16 %v54
  %v421 = vunpack.c.l.b16 %v55
  %v422 = vunpack.c.l.b16 %v56
  %v423 = vunpack.c.l.b16 %v57
  %v424 = vunpack.c.l.b16 %v58
  %v425 = vunpack.c.l.b16 %v59
  %v426 = vunpack.c.l.b16 %v60
  %v427 = vunpack.c.l.b16 %v61
  %v428 = vunpack.c.l.b16 %v62
  %v429 = vunpack.c.l.b16 %v63
  %v430 = vunpack.c.l.b16 %v64
  %v431 = vunpack.c.l.b16 %v65
  %v432 = vunpack.c.l.b16 %v66
  %v433 = vunpack.c.l.b16 %v67
  %v434 = vunpack.c.l.b16 %v68
  %v435 = vunpack.c.l.b16 %v69
  %v436 = vunpack.c.l.b16 %v70
  %v437 = vunpack.c.l.b16 %v71
  %v438 = vunpack.c.l.b16 %v72
  %v439 = vunpack.c.l.b16 %v73
  %v440 = vunpack.c.l.b16 %v74
  %v441 = vunpack.c.l.b16 %v75
  %v442 = vunpack.c.l.b16 %v76
  %v443 = vpack.c.b16 %v394, %v393
  %v444 = vpack.c.b16 %v396, %v395
  %v445 = vpack.c.b16 %v398, %v397
  %v446 = vpack.c.b16 %v400, %v399
  %v447 = vpack.c.b16 %v402, %v401
  %v448 = vpack.c.b16 %v404, %v403
  %v449 = vpack.c.b16 %v406, %v405
  %v450 = vpack.c.b16 %v408, %v407
  %v451 = vpack.c.b16 %v410, %v409
  %v452 = vpack.c.b16 %v412, %v411
  %v453 = vpack.c.b16 %v414, %v413
  %v454 = vpack.c.b16 %v416, %v415
  %v455 = vpack.c.b16 %v418, %v417
  %v456 = vpack.c.b16 %v420, %v419
  %v457 = vpack.c.b16 %v422, %v421
  %v458 = vpack.c.b16 %v424, %v423
  %v459 = vpack.c.b16 %v426, %v425
  %v460 = vpack.c.b16 %v428, %v427
  %v461 = vpack.c.b16 %v430, %v429
  %v462 = vpack.c.b16 %v432, %v431
  %v463 = vpack.c.b16 %v434, %v433
  %v464 = vpack.c.b16 %v436, %v435
  %v465 = vpack.c.b16 %v438, %v437
  %v466 = vpack.c.b16 %v440, %v439
  %v467 = vpack.c.b16 %v442, %v441
  %vm493 = vcmask 130048
  %v495 = vsel %vm493, %v290, 0
  %v498 = vsel %vm493, %v294, 0
  %v501 = vsel %vm493, %v298, 0
  %v504 = vsel %vm493, %v302, 0
  %v507 = vsel %vm493, %v306, 0
  %v510 = vsel %vm493, %v310, 0
  %v513 = vsel %vm493, %v314, 0
  %v516 = vsel %vm493, %v318, 0
  %518 = vmatprep.subr.bf16.mxu0 0
  %519 = vmatpush1.bf16.msra.mxu0 %v443
  %520 = vmatprep.subr.bf16.mxu0 0
  %521 = vmatpush1.bf16.msra.mxu0 %v444
  %522 = vmatprep.subr.bf16.mxu0 0
  %523 = vmatpush1.bf16.msra.mxu0 %v445
  %524 = vmatprep.subr.bf16.mxu0 0
  %525 = vmatpush1.bf16.msra.mxu0 %v446
  %526 = vmatprep.subr.bf16.mxu0 0
  %527 = vmatpush1.bf16.msra.mxu0 %v447
  %528 = vmatprep.subr.bf16.mxu0 0
  %529 = vmatpush1.bf16.msra.mxu0 %v448
  %530 = vmatprep.subr.bf16.mxu0 0
  %531 = vmatpush1.bf16.msra.mxu0 %v449
  %532 = vmatprep.subr.bf16.mxu0 0
  %533 = vmatpush1.bf16.msra.mxu0 %v450
  %534 = vmatprep.subr.bf16.mxu0 0
  %535 = vmatpush1.bf16.msra.mxu0 %v451
  %536 = vmatprep.subr.bf16.mxu0 0
  %537 = vmatpush1.bf16.msra.mxu0 %v452
  %538 = vmatprep.subr.bf16.mxu0 0
  %539 = vmatpush1.bf16.msra.mxu0 %v453
  %540 = vmatprep.subr.bf16.mxu0 0
  %541 = vmatpush1.bf16.msra.mxu0 %v454
  %542 = vmatprep.subr.bf16.mxu0 0
  %543 = vmatpush1.bf16.msra.mxu0 %v455
  %544 = vmatprep.subr.bf16.mxu0 0
  %545 = vmatpush1.bf16.msra.mxu0 %v456
  %546 = vmatprep.subr.bf16.mxu0 0
  %547 = vmatpush1.bf16.msra.mxu0 %v457
  %548 = vmatprep.subr.bf16.mxu0 0
  %549 = vmatpush1.bf16.msra.mxu0 %v458
  %550 = vmatprep.mubr.bf16.mxu0 %v288
  %551 = vmatmul.mubr.bf16.gmra.mrb[0].mxu0 %v287
  %v552 = vpop.f32.mrb[0].mxu0
  %v553 = vadd.f32 %v125, %v552
  %v554 = vpop.f32.mrb[0].mxu0
  %v555 = vpop.f32.mrb[0].mxu0
  %v556 = vadd.f32 %v130, %v555
  %v557 = vpop.f32.mrb[0].mxu0
  %558 = vmatprep.mubr.bf16.mxu0 %v292
  %559 = vmatmul.mubr.bf16.gmra.mrb[0].mxu0 %v291
  %v560 = vpop.f32.mrb[0].mxu0
  %v561 = vadd.f32 %v135, %v560
  %v562 = vpop.f32.mrb[0].mxu0
  %v563 = vpop.f32.mrb[0].mxu0
  %v564 = vadd.f32 %v140, %v563
  %v565 = vpop.f32.mrb[0].mxu0
  %566 = vmatprep.mubr.bf16.mxu0 %v296
  %567 = vmatmul.mubr.bf16.gmra.mrb[0].mxu0 %v295
  %v568 = vpop.f32.mrb[0].mxu0
  %v569 = vadd.f32 %v145, %v568
  %v570 = vpop.f32.mrb[0].mxu0
  %v571 = vpop.f32.mrb[0].mxu0
  %v572 = vadd.f32 %v150, %v571
  %v573 = vpop.f32.mrb[0].mxu0
  %574 = vmatprep.mubr.bf16.mxu0 %v300
  %575 = vmatmul.mubr.bf16.gmra.mrb[0].mxu0 %v299
  %v576 = vpop.f32.mrb[0].mxu0
  %v577 = vadd.f32 %v155, %v576
  %v578 = vpop.f32.mrb[0].mxu0
  %v579 = vpop.f32.mrb[0].mxu0
  %v580 = vadd.f32 %v160, %v579
  %v581 = vpop.f32.mrb[0].mxu0
  %582 = vmatprep.mubr.bf16.mxu0 %v304
  %583 = vmatmul.mubr.bf16.gmra.mrb[0].mxu0 %v303
  %v584 = vpop.f32.mrb[0].mxu0
  %v585 = vadd.f32 %v165, %v584
  %v586 = vpop.f32.mrb[0].mxu0
  %v587 = vpop.f32.mrb[0].mxu0
  %v588 = vadd.f32 %v170, %v587
  %v589 = vpop.f32.mrb[0].mxu0
  %590 = vmatprep.mubr.bf16.mxu0 %v308
  %591 = vmatmul.mubr.bf16.gmra.mrb[0].mxu0 %v307
  %v592 = vpop.f32.mrb[0].mxu0
  %v593 = vadd.f32 %v175, %v592
  %v594 = vpop.f32.mrb[0].mxu0
  %v595 = vpop.f32.mrb[0].mxu0
  %v596 = vadd.f32 %v180, %v595
  %v597 = vpop.f32.mrb[0].mxu0
  %598 = vmatprep.mubr.bf16.mxu0 %v312
  %599 = vmatmul.mubr.bf16.gmra.mrb[0].mxu0 %v311
  %v600 = vpop.f32.mrb[0].mxu0
  %v601 = vadd.f32 %v185, %v600
  %v602 = vpop.f32.mrb[0].mxu0
  %v603 = vpop.f32.mrb[0].mxu0
  %v604 = vadd.f32 %v190, %v603
  %v605 = vpop.f32.mrb[0].mxu0
  %606 = vmatprep.mubr.bf16.mxu0 %v316
  %607 = vmatmul.mubr.bf16.gmra.mrb[0].mxu0 %v315
  %v608 = vpop.f32.mrb[0].mxu0
  %v609 = vadd.f32 %v195, %v608
  %v610 = vpop.f32.mrb[0].mxu0
  %v611 = vpop.f32.mrb[0].mxu0
  %v612 = vpop.f32.mrb[0].mxu0
  %613 = vdwg.mxu0
  %614 = vmatprep.subr.bf16.mxu0 0
  %615 = vmatpush1.bf16.msra.mxu0 %v459
  %616 = vmatprep.subr.bf16.mxu0 0
  %617 = vmatpush1.bf16.msra.mxu0 %v460
  %618 = vmatprep.subr.bf16.mxu0 0
  %619 = vmatpush1.bf16.msra.mxu0 %v461
  %620 = vmatprep.subr.bf16.mxu0 0
  %621 = vmatpush1.bf16.msra.mxu0 %v462
  %622 = vmatprep.subr.bf16.mxu0 0
  %623 = vmatpush1.bf16.msra.mxu0 %v463
  %624 = vmatprep.subr.bf16.mxu0 0
  %625 = vmatpush1.bf16.msra.mxu0 %v464
  %626 = vmatprep.subr.bf16.mxu0 0
  %627 = vmatpush1.bf16.msra.mxu0 %v465
  %628 = vmatprep.subr.bf16.mxu0 0
  %629 = vmatpush1.bf16.msra.mxu0 %v466
  %630 = vmatprep.subr.bf16.mxu0 0
  %631 = vmatpush1.bf16.msra.mxu0 %v467
  %632 = vmatprep.subr.bf16.mxu0 0
  %633 = vmatpush1.bf16.msra.mxu0 0
  %634 = vmatprep.subr.bf16.mxu0 0
  %635 = vmatpush1.bf16.msra.mxu0 0
  %636 = vmatprep.subr.bf16.mxu0 0
  %637 = vmatpush1.bf16.msra.mxu0 0
  %638 = vmatprep.subr.bf16.mxu0 0
  %639 = vmatpush1.bf16.msra.mxu0 0
  %640 = vmatprep.subr.bf16.mxu0 0
  %641 = vmatpush1.bf16.msra.mxu0 0
  %642 = vmatprep.subr.bf16.mxu0 0
  %643 = vmatpush1.bf16.msra.mxu0 0
  %644 = vmatprep.subr.bf16.mxu0 0
  %645 = vmatpush1.bf16.msra.mxu0 0
  %646 = vmatprep.mubr.bf16.mxu0 %v495
  %647 = vmatmul.mubr.bf16.gmra.mrb[0].mxu0 %v289
  %v648 = vpop.f32.mrb[0].mxu0
  %v649 = vadd.f32 %v553, %v648
  %v650 = vpop.f32.mrb[0].mxu0
  %v651 = vpop.f32.mrb[0].mxu0
  %v652 = vadd.f32 %v556, %v651
  %v653 = vpop.f32.mrb[0].mxu0
  %654 = vmatprep.mubr.bf16.mxu0 %v498
  %655 = vmatmul.mubr.bf16.gmra.mrb[0].mxu0 %v293
  %v656 = vpop.f32.mrb[0].mxu0
  %v657 = vadd.f32 %v561, %v656
  %v658 = vpop.f32.mrb[0].mxu0
  %v659 = vpop.f32.mrb[0].mxu0
  %v660 = vadd.f32 %v564, %v659
  %v661 = vpop.f32.mrb[0].mxu0
  %662 = vmatprep.mubr.bf16.mxu0 %v501
  %663 = vmatmul.mubr.bf16.gmra.mrb[0].mxu0 %v297
  %v664 = vpop.f32.mrb[0].mxu0
  %v665 = vadd.f32 %v569, %v664
  %v666 = vpop.f32.mrb[0].mxu0
  %v667 = vpop.f32.mrb[0].mxu0
  %v668 = vadd.f32 %v572, %v667
  %v669 = vpop.f32.mrb[0].mxu0
  %670 = vmatprep.mubr.bf16.mxu0 %v504
  %671 = vmatmul.mubr.bf16.gmra.mrb[0].mxu0 %v301
  %v672 = vpop.f32.mrb[0].mxu0
  %v673 = vadd.f32 %v577, %v672
  %v674 = vpop.f32.mrb[0].mxu0
  %v675 = vpop.f32.mrb[0].mxu0
  %v676 = vadd.f32 %v580, %v675
  %v677 = vpop.f32.mrb[0].mxu0
  %678 = vmatprep.mubr.bf16.mxu0 %v507
  %679 = vmatmul.mubr.bf16.gmra.mrb[0].mxu0 %v305
  %v680 = vpop.f32.mrb[0].mxu0
  %v681 = vadd.f32 %v585, %v680
  %v682 = vpop.f32.mrb[0].mxu0
  %v683 = vpop.f32.mrb[0].mxu0
  %v684 = vadd.f32 %v588, %v683
  %v685 = vpop.f32.mrb[0].mxu0
  %686 = vmatprep.mubr.bf16.mxu0 %v510
  %687 = vmatmul.mubr.bf16.gmra.mrb[0].mxu0 %v309
  %v688 = vpop.f32.mrb[0].mxu0
  %v689 = vadd.f32 %v593, %v688
  %v690 = vpop.f32.mrb[0].mxu0
  %v691 = vpop.f32.mrb[0].mxu0
  %v692 = vadd.f32 %v596, %v691
  %v693 = vpop.f32.mrb[0].mxu0
  %694 = vmatprep.mubr.bf16.mxu0 %v513
  %695 = vmatmul.mubr.bf16.gmra.mrb[0].mxu0 %v313
  %v696 = vpop.f32.mrb[0].mxu0
  %v697 = vadd.f32 %v601, %v696
  %v698 = vpop.f32.mrb[0].mxu0
  %v699 = vpop.f32.mrb[0].mxu0
  %v700 = vadd.f32 %v604, %v699
  %v701 = vpop.f32.mrb[0].mxu0
  %702 = vmatprep.mubr.bf16.mxu0 %v516
  %703 = vmatmul.mubr.bf16.gmra.mrb[0].mxu0 %v317
  %v704 = vpop.f32.mrb[0].mxu0
  %v705 = vadd.f32 %v609, %v704
  %v706 = vpop.f32.mrb[0].mxu0
  %v707 = vpop.f32.mrb[0].mxu0
  %v708 = vpop.f32.mrb[0].mxu0
  %709 = vdwg.mxu0
  %v710 = vmax.f32 %v649, 0.0
  %v711 = vmax.f32 %v652, 0.0
  %v712 = vmax.f32 %v657, 0.0
  %v713 = vmax.f32 %v660, 0.0
  %v714 = vmax.f32 %v665, 0.0
  %v715 = vmax.f32 %v668, 0.0
  %v716 = vmax.f32 %v673, 0.0
  %v717 = vmax.f32 %v676, 0.0
  %v718 = vmax.f32 %v681, 0.0
  %v719 = vmax.f32 %v684, 0.0
  %v720 = vmax.f32 %v689, 0.0
  %v721 = vmax.f32 %v692, 0.0
  %v722 = vmax.f32 %v697, 0.0
  %v723 = vmax.f32 %v700, 0.0
  %v724 = vmax.f32 %v705, 0.0
  %v725 = vpack.c.bf16 %v711, %v710
  %v726 = vpack.c.bf16 %v713, %v712
  %v727 = vpack.c.bf16 %v715, %v714
  %v728 = vpack.c.bf16 %v717, %v716
  %v729 = vpack.c.bf16 %v719, %v718
  %v730 = vpack.c.bf16 %v721, %v720
  %v731 = vpack.c.bf16 %v723, %v722
  %v732 = vpack.c.bf16 %v724, %v724
  %v733 = vld [vmem:[%s3] sm:$0xf]
  %v734 = vld [vmem:[%s3 + $0x4] sm:$0xf]
  %v735 = vld [vmem:[%s3 + $0x8] sm:$0xf]
  %v736 = vld [vmem:[%s3 + $0xc] sm:$0xf]
  %v737 = vld [vmem:[%s3 + $0x10] sm:$0xf]
  %v738 = vld [vmem:[%s3 + $0x14] sm:$0xf]
  %v739 = vld [vmem:[%s3 + $0x18] sm:$0xf]
  %v740 = vld [vmem:[%s3 + $0x1c] sm:$0xf]
  %v741 = vld [vmem:[%s3 + $0x20] sm:$0xf]
  %v742 = vld [vmem:[%s3 + $0x24] sm:$0xf]
  %v743 = vld [vmem:[%s3 + $0x28] sm:$0x3]
  %v744 = vld [vmem:[%s4] sm:$0xff]
  %v745 = vld [vmem:[%s4 + $0x8] sm:$0xff]
  %v746 = vld [vmem:[%s4 + $0x10] sm:$0xff]
  %v747 = vld [vmem:[%s4 + $0x18] sm:$0xff]
  %v748 = vld [vmem:[%s4 + $0x20] sm:$0xff]
  %v749 = vld [vmem:[%s4 + $0x28] sm:$0xff]
  %v750 = vld [vmem:[%s4 + $0x30] sm:$0xff]
  %v751 = vld [vmem:[%s4 + $0x38] sm:$0xff]
  %v752 = vld [vmem:[%s4 + $0x40] sm:$0xff]
  %v753 = vld [vmem:[%s4 + $0x48] sm:$0xff]
  %v754 = vld [vmem:[%s4 + $0x50] sm:$0xf]
  %756 = vset.pattern.permute.xlu0 0
  %757 = vperm.xlu0 %756, %v744
  %v758 = vpop.permute.xlu0 %757
  %761 = vset.pattern.permute.xlu0 0
  %762 = vperm.xlu0 %761, %v745
  %v763 = vpop.permute.xlu0 %762
  %766 = vset.pattern.permute.xlu0 0
  %767 = vperm.xlu0 %766, %v746
  %v768 = vpop.permute.xlu0 %767
  %771 = vset.pattern.permute.xlu0 0
  %772 = vperm.xlu0 %771, %v747
  %v773 = vpop.permute.xlu0 %772
  %776 = vset.pattern.permute.xlu0 0
  %777 = vperm.xlu0 %776, %v748
  %v778 = vpop.permute.xlu0 %777
  %781 = vset.pattern.permute.xlu0 0
  %782 = vperm.xlu0 %781, %v749
  %v783 = vpop.permute.xlu0 %782
  %786 = vset.pattern.permute.xlu0 0
  %787 = vperm.xlu0 %786, %v750
  %v788 = vpop.permute.xlu0 %787
  %791 = vset.pattern.permute.xlu0 0
  %792 = vperm.xlu0 %791, %v751
  %v793 = vpop.permute.xlu0 %792
  %796 = vset.pattern.permute.xlu0 0
  %797 = vperm.xlu0 %796, %v752
  %v798 = vpop.permute.xlu0 %797
  %801 = vset.pattern.permute.xlu0 0
  %802 = vperm.xlu0 %801, %v753
  %v803 = vpop.permute.xlu0 %802
  %806 = vset.pattern.permute.xlu0 0
  %807 = vperm.xlu0 %806, %v754
  %v808 = vpop.permute.xlu0 %807
  %v821 = vunpack.c.l.b16 %v733
  %v822 = vunpack.c.l.b16 %v734
  %v823 = vunpack.c.l.b16 %v735
  %v824 = vunpack.c.l.b16 %v736
  %v825 = vunpack.c.l.b16 %v737
  %v826 = vunpack.c.l.b16 %v738
  %v827 = vunpack.c.l.b16 %v739
  %v828 = vunpack.c.l.b16 %v740
  %v829 = vunpack.c.l.b16 %v741
  %v830 = vunpack.c.l.b16 %v742
  %v831 = vunpack.c.l.b16 %v743
  %v832 = vpack.c.b16 %v822, %v821
  %v833 = vpack.c.b16 %v824, %v823
  %v834 = vpack.c.b16 %v826, %v825
  %v835 = vpack.c.b16 %v828, %v827
  %v836 = vpack.c.b16 %v830, %v829
  %v837 = vpack.c.b16 %v831, %v831
  %vm838 = vcmask 982016
  %v840 = vsel %vm838, %v832, 0
  %v843 = vsel %vm838, %v833, 0
  %v846 = vsel %vm838, %v834, 0
  %v849 = vsel %vm838, %v835, 0
  %v852 = vsel %vm838, %v836, 0
  %v855 = vsel %vm838, %v837, 0
  %vm857 = vcmask 1043456
  %v859 = vsel %vm857, %v732, 0
  %861 = vmatprep.subr.bf16.mxu0 0
  %862 = vmatpush1.bf16.msra.mxu0 %v725
  %863 = vmatprep.subr.bf16.mxu0 0
  %864 = vmatpush1.bf16.msra.mxu0 %v726
  %865 = vmatprep.subr.bf16.mxu0 0
  %866 = vmatpush1.bf16.msra.mxu0 %v727
  %867 = vmatprep.subr.bf16.mxu0 0
  %868 = vmatpush1.bf16.msra.mxu0 %v728
  %869 = vmatprep.subr.bf16.mxu0 0
  %870 = vmatpush1.bf16.msra.mxu0 %v729
  %871 = vmatprep.subr.bf16.mxu0 0
  %872 = vmatpush1.bf16.msra.mxu0 %v730
  %873 = vmatprep.subr.bf16.mxu0 0
  %874 = vmatpush1.bf16.msra.mxu0 %v731
  %875 = vmatprep.subr.bf16.mxu0 0
  %876 = vmatpush1.bf16.msra.mxu0 %v859
  %877 = vmatprep.subr.bf16.mxu0 0
  %878 = vmatpush1.bf16.msra.mxu0 0
  %879 = vmatprep.subr.bf16.mxu0 0
  %880 = vmatpush1.bf16.msra.mxu0 0
  %881 = vmatprep.subr.bf16.mxu0 0
  %882 = vmatpush1.bf16.msra.mxu0 0
  %883 = vmatprep.subr.bf16.mxu0 0
  %884 = vmatpush1.bf16.msra.mxu0 0
  %885 = vmatprep.subr.bf16.mxu0 0
  %886 = vmatpush1.bf16.msra.mxu0 0
  %887 = vmatprep.subr.bf16.mxu0 0
  %888 = vmatpush1.bf16.msra.mxu0 0
  %889 = vmatprep.subr.bf16.mxu0 0
  %890 = vmatpush1.bf16.msra.mxu0 0
  %891 = vmatprep.subr.bf16.mxu0 0
  %892 = vmatpush1.bf16.msra.mxu0 0
  %893 = vmatprep.mubr.bf16.mxu0 0
  %894 = vmatmul.mubr.bf16.gmra.mrb[0].mxu0 %v840
  %v895 = vpop.f32.mrb[0].mxu0
  %v896 = vadd.f32 %v758, %v895
  %v897 = vpop.f32.mrb[0].mxu0
  %v898 = vpop.f32.mrb[0].mxu0
  %v899 = vadd.f32 %v763, %v898
  %v900 = vpop.f32.mrb[0].mxu0
  %901 = vmatprep.mubr.bf16.mxu0 0
  %902 = vmatmul.mubr.bf16.gmra.mrb[0].mxu0 %v843
  %v903 = vpop.f32.mrb[0].mxu0
  %v904 = vadd.f32 %v768, %v903
  %v905 = vpop.f32.mrb[0].mxu0
  %v906 = vpop.f32.mrb[0].mxu0
  %v907 = vadd.f32 %v773, %v906
  %v908 = vpop.f32.mrb[0].mxu0
  %909 = vmatprep.mubr.bf16.mxu0 0
  %910 = vmatmul.mubr.bf16.gmra.mrb[0].mxu0 %v846
  %v911 = vpop.f32.mrb[0].mxu0
  %v912 = vadd.f32 %v778, %v911
  %v913 = vpop.f32.mrb[0].mxu0
  %v914 = vpop.f32.mrb[0].mxu0
  %v915 = vadd.f32 %v783, %v914
  %v916 = vpop.f32.mrb[0].mxu0
  %917 = vmatprep.mubr.bf16.mxu0 0
  %918 = vmatmul.mubr.bf16.gmra.mrb[0].mxu0 %v849
  %v919 = vpop.f32.mrb[0].mxu0
  %v920 = vadd.f32 %v788, %v919
  %v921 = vpop.f32.mrb[0].mxu0
  %v922 = vpop.f32.mrb[0].mxu0
  %v923 = vadd.f32 %v793, %v922
  %v924 = vpop.f32.mrb[0].mxu0
  %925 = vmatprep.mubr.bf16.mxu0 0
  %926 = vmatmul.mubr.bf16.gmra.mrb[0].mxu0 %v852
  %v927 = vpop.f32.mrb[0].mxu0
  %v928 = vadd.f32 %v798, %v927
  %v929 = vpop.f32.mrb[0].mxu0
  %v930 = vpop.f32.mrb[0].mxu0
  %v931 = vadd.f32 %v803, %v930
  %v932 = vpop.f32.mrb[0].mxu0
  %933 = vmatprep.mubr.bf16.mxu0 0
  %934 = vmatmul.mubr.bf16.gmra.mrb[0].mxu0 %v855
  %v935 = vpop.f32.mrb[0].mxu0
  %v936 = vadd.f32 %v808, %v935
  %v937 = vpop.f32.mrb[0].mxu0
  %v938 = vpop.f32.mrb[0].mxu0
  %v939 = vpop.f32.mrb[0].mxu0
  %940 = vdwg.mxu0
  %v941 = vmax.f32 %v896, 0.0
  %v942 = vmax.f32 %v899, 0.0
  %v943 = vmax.f32 %v904, 0.0
  %v944 = vmax.f32 %v907, 0.0
  %v945 = vmax.f32 %v912, 0.0
  %v946 = vmax.f32 %v915, 0.0
  %v947 = vmax.f32 %v920, 0.0
  %v948 = vmax.f32 %v923, 0.0
  %v949 = vmax.f32 %v928, 0.0
  %v950 = vmax.f32 %v931, 0.0
  %v951 = vmax.f32 %v936, 0.0
  %v952 = vpack.c.bf16 %v942, %v941
  %v953 = vpack.c.bf16 %v944, %v943
  %v954 = vpack.c.bf16 %v946, %v945
  %v955 = vpack.c.bf16 %v948, %v947
  %v956 = vpack.c.bf16 %v950, %v949
  %v957 = vpack.c.bf16 %v951, %v951
  %v958 = vld [vmem:[%s5] sm:$0xf]
  %v959 = vld [vmem:[%s5 + $0x4] sm:$0x1]
  %v960 = vld [vmem:[%s6] sm:$0xff]
  %v961 = vld [vmem:[%s6 + $0x8] sm:$0x3]
  %963 = vset.pattern.permute.xlu0 0
  %964 = vperm.xlu0 %963, %v960
  %v965 = vpop.permute.xlu0 %964
  %968 = vset.pattern.permute.xlu0 0
  %969 = vperm.xlu0 %968, %v961
  %v970 = vpop.permute.xlu0 %969
  %v974 = vunpack.c.l.b16 %v958
  %v975 = vunpack.c.l.b16 %v959
  %v976 = vpack.c.b16 %v975, %v974
  %vm977 = vcmask 687104
  %v979 = vsel %vm977, %v976, 0
  %vm981 = vcmask 1041408
  %v983 = vsel %vm981, %v957, 0
  %985 = vmatprep.subr.bf16.mxu0 0
  %986 = vmatpush1.bf16.msra.mxu0 %v952
  %987 = vmatprep.subr.bf16.mxu0 0
  %988 = vmatpush1.bf16.msra.mxu0 %v953
  %989 = vmatprep.subr.bf16.mxu0 0
  %990 = vmatpush1.bf16.msra.mxu0 %v954
  %991 = vmatprep.subr.bf16.mxu0 0
  %992 = vmatpush1.bf16.msra.mxu0 %v955
  %993 = vmatprep.subr.bf16.mxu0 0
  %994 = vmatpush1.bf16.msra.mxu0 %v956
  %995 = vmatprep.subr.bf16.mxu0 0
  %996 = vmatpush1.bf16.msra.mxu0 %v983
  %997 = vmatprep.subr.bf16.mxu0 0
  %998 = vmatpush1.bf16.msra.mxu0 0
  %999 = vmatprep.subr.bf16.mxu0 0
  %1000 = vmatpush1.bf16.msra.mxu0 0
  %1001 = vmatprep.subr.bf16.mxu0 0
  %1002 = vmatpush1.bf16.msra.mxu0 0
  %1003 = vmatprep.subr.bf16.mxu0 0
  %1004 = vmatpush1.bf16.msra.mxu0 0
  %1005 = vmatprep.subr.bf16.mxu0 0
  %1006 = vmatpush1.bf16.msra.mxu0 0
  %1007 = vmatprep.subr.bf16.mxu0 0
  %1008 = vmatpush1.bf16.msra.mxu0 0
  %1009 = vmatprep.subr.bf16.mxu0 0
  %1010 = vmatpush1.bf16.msra.mxu0 0
  %1011 = vmatprep.subr.bf16.mxu0 0
  %1012 = vmatpush1.bf16.msra.mxu0 0
  %1013 = vmatprep.subr.bf16.mxu0 0
  %1014 = vmatpush1.bf16.msra.mxu0 0
  %1015 = vmatprep.subr.bf16.mxu0 0
  %1016 = vmatpush1.bf16.msra.mxu0 0
  %1017 = vmatprep.mubr.bf16.mxu0 0
  %1018 = vmatmul.mubr.bf16.gmra.mrb[0].mxu0 %v979
  %v1019 = vpop.f32.mrb[0].mxu0
  %v1020 = vadd.f32 %v965, %v1019
  %v1021 = vpop.f32.mrb[0].mxu0
  %v1022 = vpop.f32.mrb[0].mxu0
  %v1023 = vadd.f32 %v970, %v1022
  %v1024 = vpop.f32.mrb[0].mxu0
  %1025 = vdwg.mxu0
  %vm1026 = vcmask 15360
  %1027 = vst.msk [vmem:[%s7] sm:$0xff] %vm1026, %v1020
  %vm1028 = vcmask 9216
  %1029 = vst.msk [vmem:[%s7 + $0x8] sm:$0x3] %vm1028, %v1023
  // Predicated region
  $region30: #{net_forward.5} parent=0 // pred_check
    _
  $region31: #{net_forward.5} parent=0 // pred_check_branch
    %1031 = sbr.rel (0) target = $region33
  $region32: #{net_forward.5} parent=0 // pred_region
    _
  $region33: #{net_forward.5} parent=0 // pred_fallthru
    _
  // Predicated region
  $region34: #{net_forward.5} parent=0 // pred_check
    _
  $region35: #{net_forward.5} parent=0 // pred_check_branch
    %1033 = sbr.rel (0) target = $region37
  $region36: #{net_forward.5} parent=0 // pred_region
    _
  $region37: #{net_forward.5} parent=0 // pred_fallthru
    _

</llo_original>
